<compile_context>
chip_gen: v7x
topology: tpu7x:2x2x1
jax: 0.10.0
libtpu: 0.0.40
codegen_flags: <defaults>
</compile_context>

<pallas_src>
import jax
import jax.numpy as jnp
from jax import lax
from jax.experimental import pallas as pl
from jax.experimental.pallas import tpu as pltpu

CHUNK_ROWS = 8        # 8 sublanes x 128 lanes = one f32 vreg per feature per chunk
MAX_TILE_ROWS = 256   # 256*128 = 32768 batch elems per grid step (x tile: 256 KiB)
TARGET_TILES = 8      # aim for ~8 grid steps so both v7x TensorCores get work


def mlp_kernel(x_ref, w1_ref, b1_ref, w2_ref, b2_ref, w3_ref, b3_ref, o_ref):
    """x_ref: [2, TR, 128] VMEM; o_ref: [TR, 128] VMEM; w*/b*: flat 1-D f32 SMEM."""
    tile_rows = o_ref.shape[0]
    n_chunks = tile_rows // CHUNK_ROWS

    # Hoist all 151 scalar weight/bias reads (SMEM -> sregs) out of the chunk loop.
    w1 = [[w1_ref[2 * j + k] for k in range(2)] for j in range(10)]
    b1 = [b1_ref[j] for j in range(10)]
    w2 = [[w2_ref[10 * j + k] for k in range(10)] for j in range(10)]
    b2 = [b2_ref[j] for j in range(10)]
    w3 = [w3_ref[k] for k in range(10)]
    b3 = b3_ref[0]

    def chunk(c, carry):
        r0 = pl.multiple_of(c * CHUNK_ROWS, CHUNK_ROWS)
        x0 = x_ref[0, pl.ds(r0, CHUNK_ROWS), :]          # [8, 128] feature 0
        x1 = x_ref[1, pl.ds(r0, CHUNK_ROWS), :]          # [8, 128] feature 1

        # Layer 1 + ReLU: 10 VPU broadcast-MACs, activations live in vregs.
        h1 = [jnp.maximum(w1[j][0] * x0 + w1[j][1] * x1 + b1[j], 0.0)
              for j in range(10)]

        # Layer 2 + ReLU.
        h2 = []
        for j in range(10):
            acc = w2[j][0] * h1[0]
            for k in range(1, 10):
                acc = acc + w2[j][k] * h1[k]
            h2.append(jnp.maximum(acc + b2[j], 0.0))

        # Layer 3 (no activation); lane+sublane-dense store.
        out = w3[0] * h2[0]
        for k in range(1, 10):
            out = out + w3[k] * h2[k]
        o_ref[pl.ds(r0, CHUNK_ROWS), :] = out + b3
        return carry

    lax.fori_loop(0, n_chunks, chunk, 0, unroll=min(4, n_chunks))


def _pick_tile_rows(n_rows_raw):
    """Large, N-derived batch tile (rows of 128), multiple of CHUNK_ROWS."""
    tr = min(MAX_TILE_ROWS, max(CHUNK_ROWS, pl.cdiv(n_rows_raw, TARGET_TILES)))
    return pl.cdiv(tr, CHUNK_ROWS) * CHUNK_ROWS


@jax.jit
def circle_model_v2(x, params):
    """x: [N, 2] f32 -> [N, 1] f32, same forward semantics as the PyTorch module."""
    w1, b1, w2, b2, w3, b3 = (params["w1"], params["b1"], params["w2"],
                              params["b2"], params["w3"], params["b3"])
    N = x.shape[0]

    # Static tile / padding selection.
    n_rows_raw = pl.cdiv(N, 128)
    tile_rows = _pick_tile_rows(n_rows_raw)
    n_rows = pl.cdiv(n_rows_raw, tile_rows) * tile_rows
    n_pad = n_rows * 128

    # Layout plumbing (one fused XLA copy of a tiny [N,2] array):
    # [N,2] -> [2, n_rows, 128] so each input feature is a dense slab.
    x_pad = jnp.pad(x, ((0, n_pad - N), (0, 0))) if n_pad != N else x
    x_slab = x_pad.reshape(n_rows, 128, 2).transpose(2, 0, 1)

    smem = pl.BlockSpec(memory_space=pltpu.MemorySpace.SMEM)
    out = pl.pallas_call(
        mlp_kernel,
        out_shape=jax.ShapeDtypeStruct((n_rows, 128), jnp.float32),
        grid=(n_rows // tile_rows,),
        in_specs=[
            pl.BlockSpec((2, tile_rows, 128), lambda i: (0, i, 0)),  # pipelined x tiles
            smem, smem, smem, smem, smem, smem,                      # scalar params
        ],
        out_specs=pl.BlockSpec((tile_rows, 128), lambda i: (i, 0)),
        compiler_params=pltpu.CompilerParams(
            dimension_semantics=("parallel",),   # shard batch tiles across TCs (v7x)
        ),
    )(x_slab,
      w1.reshape(-1), b1.reshape(-1),
      w2.reshape(-1), b2.reshape(-1),
      w3.reshape(-1), b3.reshape(-1))

    # Drop padding, return [N, 1] exactly like the PyTorch module.
    return out.reshape(-1)[:N].reshape(N, 1)


def init_params(key):
    """Deterministic init matching nn.Linear of CircleModelV2 (weight [out, in])."""
    k1, k2, k3, k4, k5, k6 = jax.random.split(key, 6)

    def lin(kw, kb, fan_in, fan_out):
        bound = 1.0 / (fan_in ** 0.5)
        w = jax.random.uniform(kw, (fan_out, fan_in), jnp.float32, -bound, bound)
        b = jax.random.uniform(kb, (fan_out, 1), jnp.float32, -bound, bound)
        return w, b

    w1, b1 = lin(k1, k2, 2, 10)
    w2, b2 = lin(k3, k4, 10, 10)
    w3, b3 = lin(k5, k6, 10, 1)
    return dict(w1=w1, b1=b1, w2=w2, b2=b2, w3=w3, b3=b3)


def reference(x, p):
    # HIGHEST precision: the kernel does true f32 MACs, so the reference must not
    # carry the default bf16 MXU rounding.
    hi = jax.lax.Precision.HIGHEST
    h1 = jnp.maximum(jnp.dot(x, p["w1"].T, precision=hi) + p["b1"].T, 0.0)
    h2 = jnp.maximum(jnp.dot(h1, p["w2"].T, precision=hi) + p["b2"].T, 0.0)
    return jnp.dot(h2, p["w3"].T, precision=hi) + p["b3"].T


if __name__ == "__main__":
    key = jax.random.PRNGKey(0)
    kx, kp = jax.random.split(key)
    N = 1000  # make_circles-sized batch from 06_non_linear.py
    x = jax.random.normal(kx, (N, 2), jnp.float32)
    params = init_params(kp)

    out = jax.block_until_ready(circle_model_v2(x, params))
    ref = reference(x, params)

    assert out.shape == (N, 1)
    assert jnp.allclose(out, ref, atol=1e-5, rtol=1e-5), float(jnp.abs(out - ref).max())
    print("KERNEL_OK")
</pallas_src>

<mosaic_0001>
module attributes {stable_mosaic.version = 11 : i64} {
  func.func @mlp_kernel(%arg0: i32, %arg1: memref<2x8x128xf32, #tpu.memory_space<vmem>>, %arg2: memref<20xf32, #tpu.memory_space<smem>>, %arg3: memref<10xf32, #tpu.memory_space<smem>>, %arg4: memref<100xf32, #tpu.memory_space<smem>>, %arg5: memref<10xf32, #tpu.memory_space<smem>>, %arg6: memref<10xf32, #tpu.memory_space<smem>>, %arg7: memref<1xf32, #tpu.memory_space<smem>>, %arg8: memref<8x128xf32, #tpu.memory_space<vmem>>) attributes {dimension_semantics = [#tpu.dimension_semantics<parallel>], iteration_bounds = array<i64: 1>, scalar_prefetch = 0 : i64, scratch_operands = 0 : i64, tpu.core_type = #tpu.core_type<tc>, window_params = [{transform_indices = @transform_0, window_bounds = array<i64: 2, 8, 128>}, {transform_indices = @transform_1, window_bounds = array<i64: 20>}, {transform_indices = @transform_2, window_bounds = array<i64: 10>}, {transform_indices = @transform_3, window_bounds = array<i64: 100>}, {transform_indices = @transform_4, window_bounds = array<i64: 10>}, {transform_indices = @transform_5, window_bounds = array<i64: 10>}, {transform_indices = @transform_6, window_bounds = array<i64: 1>}, {transform_indices = @transform_7, window_bounds = array<i64: 8, 128>}]} {
    %c0 = arith.constant 0 : index
    %0 = memref.load %arg2[%c0] : memref<20xf32, #tpu.memory_space<smem>>
    %c1 = arith.constant 1 : index
    %1 = memref.load %arg2[%c1] : memref<20xf32, #tpu.memory_space<smem>>
    %c2 = arith.constant 2 : index
    %2 = memref.load %arg2[%c2] : memref<20xf32, #tpu.memory_space<smem>>
    %c3 = arith.constant 3 : index
    %3 = memref.load %arg2[%c3] : memref<20xf32, #tpu.memory_space<smem>>
    %c4 = arith.constant 4 : index
    %4 = memref.load %arg2[%c4] : memref<20xf32, #tpu.memory_space<smem>>
    %c5 = arith.constant 5 : index
    %5 = memref.load %arg2[%c5] : memref<20xf32, #tpu.memory_space<smem>>
    %c6 = arith.constant 6 : index
    %6 = memref.load %arg2[%c6] : memref<20xf32, #tpu.memory_space<smem>>
    %c7 = arith.constant 7 : index
    %7 = memref.load %arg2[%c7] : memref<20xf32, #tpu.memory_space<smem>>
    %c8 = arith.constant 8 : index
    %8 = memref.load %arg2[%c8] : memref<20xf32, #tpu.memory_space<smem>>
    %c9 = arith.constant 9 : index
    %9 = memref.load %arg2[%c9] : memref<20xf32, #tpu.memory_space<smem>>
    %c10 = arith.constant 10 : index
    %10 = memref.load %arg2[%c10] : memref<20xf32, #tpu.memory_space<smem>>
    %c11 = arith.constant 11 : index
    %11 = memref.load %arg2[%c11] : memref<20xf32, #tpu.memory_space<smem>>
    %c12 = arith.constant 12 : index
    %12 = memref.load %arg2[%c12] : memref<20xf32, #tpu.memory_space<smem>>
    %c13 = arith.constant 13 : index
    %13 = memref.load %arg2[%c13] : memref<20xf32, #tpu.memory_space<smem>>
    %c14 = arith.constant 14 : index
    %14 = memref.load %arg2[%c14] : memref<20xf32, #tpu.memory_space<smem>>
    %c15 = arith.constant 15 : index
    %15 = memref.load %arg2[%c15] : memref<20xf32, #tpu.memory_space<smem>>
    %c16 = arith.constant 16 : index
    %16 = memref.load %arg2[%c16] : memref<20xf32, #tpu.memory_space<smem>>
    %c17 = arith.constant 17 : index
    %17 = memref.load %arg2[%c17] : memref<20xf32, #tpu.memory_space<smem>>
    %c18 = arith.constant 18 : index
    %18 = memref.load %arg2[%c18] : memref<20xf32, #tpu.memory_space<smem>>
    %c19 = arith.constant 19 : index
    %19 = memref.load %arg2[%c19] : memref<20xf32, #tpu.memory_space<smem>>
    %c0_0 = arith.constant 0 : index
    %20 = memref.load %arg3[%c0_0] : memref<10xf32, #tpu.memory_space<smem>>
    %c1_1 = arith.constant 1 : index
    %21 = memref.load %arg3[%c1_1] : memref<10xf32, #tpu.memory_space<smem>>
    %c2_2 = arith.constant 2 : index
    %22 = memref.load %arg3[%c2_2] : memref<10xf32, #tpu.memory_space<smem>>
    %c3_3 = arith.constant 3 : index
    %23 = memref.load %arg3[%c3_3] : memref<10xf32, #tpu.memory_space<smem>>
    %c4_4 = arith.constant 4 : index
    %24 = memref.load %arg3[%c4_4] : memref<10xf32, #tpu.memory_space<smem>>
    %c5_5 = arith.constant 5 : index
    %25 = memref.load %arg3[%c5_5] : memref<10xf32, #tpu.memory_space<smem>>
    %c6_6 = arith.constant 6 : index
    %26 = memref.load %arg3[%c6_6] : memref<10xf32, #tpu.memory_space<smem>>
    %c7_7 = arith.constant 7 : index
    %27 = memref.load %arg3[%c7_7] : memref<10xf32, #tpu.memory_space<smem>>
    %c8_8 = arith.constant 8 : index
    %28 = memref.load %arg3[%c8_8] : memref<10xf32, #tpu.memory_space<smem>>
    %c9_9 = arith.constant 9 : index
    %29 = memref.load %arg3[%c9_9] : memref<10xf32, #tpu.memory_space<smem>>
    %c0_10 = arith.constant 0 : index
    %30 = memref.load %arg4[%c0_10] : memref<100xf32, #tpu.memory_space<smem>>
    %c1_11 = arith.constant 1 : index
    %31 = memref.load %arg4[%c1_11] : memref<100xf32, #tpu.memory_space<smem>>
    %c2_12 = arith.constant 2 : index
    %32 = memref.load %arg4[%c2_12] : memref<100xf32, #tpu.memory_space<smem>>
    %c3_13 = arith.constant 3 : index
    %33 = memref.load %arg4[%c3_13] : memref<100xf32, #tpu.memory_space<smem>>
    %c4_14 = arith.constant 4 : index
    %34 = memref.load %arg4[%c4_14] : memref<100xf32, #tpu.memory_space<smem>>
    %c5_15 = arith.constant 5 : index
    %35 = memref.load %arg4[%c5_15] : memref<100xf32, #tpu.memory_space<smem>>
    %c6_16 = arith.constant 6 : index
    %36 = memref.load %arg4[%c6_16] : memref<100xf32, #tpu.memory_space<smem>>
    %c7_17 = arith.constant 7 : index
    %37 = memref.load %arg4[%c7_17] : memref<100xf32, #tpu.memory_space<smem>>
    %c8_18 = arith.constant 8 : index
    %38 = memref.load %arg4[%c8_18] : memref<100xf32, #tpu.memory_space<smem>>
    %c9_19 = arith.constant 9 : index
    %39 = memref.load %arg4[%c9_19] : memref<100xf32, #tpu.memory_space<smem>>
    %c10_20 = arith.constant 10 : index
    %40 = memref.load %arg4[%c10_20] : memref<100xf32, #tpu.memory_space<smem>>
    %c11_21 = arith.constant 11 : index
    %41 = memref.load %arg4[%c11_21] : memref<100xf32, #tpu.memory_space<smem>>
    %c12_22 = arith.constant 12 : index
    %42 = memref.load %arg4[%c12_22] : memref<100xf32, #tpu.memory_space<smem>>
    %c13_23 = arith.constant 13 : index
    %43 = memref.load %arg4[%c13_23] : memref<100xf32, #tpu.memory_space<smem>>
    %c14_24 = arith.constant 14 : index
    %44 = memref.load %arg4[%c14_24] : memref<100xf32, #tpu.memory_space<smem>>
    %c15_25 = arith.constant 15 : index
    %45 = memref.load %arg4[%c15_25] : memref<100xf32, #tpu.memory_space<smem>>
    %c16_26 = arith.constant 16 : index
    %46 = memref.load %arg4[%c16_26] : memref<100xf32, #tpu.memory_space<smem>>
    %c17_27 = arith.constant 17 : index
    %47 = memref.load %arg4[%c17_27] : memref<100xf32, #tpu.memory_space<smem>>
    %c18_28 = arith.constant 18 : index
    %48 = memref.load %arg4[%c18_28] : memref<100xf32, #tpu.memory_space<smem>>
    %c19_29 = arith.constant 19 : index
    %49 = memref.load %arg4[%c19_29] : memref<100xf32, #tpu.memory_space<smem>>
    %c20 = arith.constant 20 : index
    %50 = memref.load %arg4[%c20] : memref<100xf32, #tpu.memory_space<smem>>
    %c21 = arith.constant 21 : index
    %51 = memref.load %arg4[%c21] : memref<100xf32, #tpu.memory_space<smem>>
    %c22 = arith.constant 22 : index
    %52 = memref.load %arg4[%c22] : memref<100xf32, #tpu.memory_space<smem>>
    %c23 = arith.constant 23 : index
    %53 = memref.load %arg4[%c23] : memref<100xf32, #tpu.memory_space<smem>>
    %c24 = arith.constant 24 : index
    %54 = memref.load %arg4[%c24] : memref<100xf32, #tpu.memory_space<smem>>
    %c25 = arith.constant 25 : index
    %55 = memref.load %arg4[%c25] : memref<100xf32, #tpu.memory_space<smem>>
    %c26 = arith.constant 26 : index
    %56 = memref.load %arg4[%c26] : memref<100xf32, #tpu.memory_space<smem>>
    %c27 = arith.constant 27 : index
    %57 = memref.load %arg4[%c27] : memref<100xf32, #tpu.memory_space<smem>>
    %c28 = arith.constant 28 : index
    %58 = memref.load %arg4[%c28] : memref<100xf32, #tpu.memory_space<smem>>
    %c29 = arith.constant 29 : index
    %59 = memref.load %arg4[%c29] : memref<100xf32, #tpu.memory_space<smem>>
    %c30 = arith.constant 30 : index
    %60 = memref.load %arg4[%c30] : memref<100xf32, #tpu.memory_space<smem>>
    %c31 = arith.constant 31 : index
    %61 = memref.load %arg4[%c31] : memref<100xf32, #tpu.memory_space<smem>>
    %c32 = arith.constant 32 : index
    %62 = memref.load %arg4[%c32] : memref<100xf32, #tpu.memory_space<smem>>
    %c33 = arith.constant 33 : index
    %63 = memref.load %arg4[%c33] : memref<100xf32, #tpu.memory_space<smem>>
    %c34 = arith.constant 34 : index
    %64 = memref.load %arg4[%c34] : memref<100xf32, #tpu.memory_space<smem>>
    %c35 = arith.constant 35 : index
    %65 = memref.load %arg4[%c35] : memref<100xf32, #tpu.memory_space<smem>>
    %c36 = arith.constant 36 : index
    %66 = memref.load %arg4[%c36] : memref<100xf32, #tpu.memory_space<smem>>
    %c37 = arith.constant 37 : index
    %67 = memref.load %arg4[%c37] : memref<100xf32, #tpu.memory_space<smem>>
    %c38 = arith.constant 38 : index
    %68 = memref.load %arg4[%c38] : memref<100xf32, #tpu.memory_space<smem>>
    %c39 = arith.constant 39 : index
    %69 = memref.load %arg4[%c39] : memref<100xf32, #tpu.memory_space<smem>>
    %c40 = arith.constant 40 : index
    %70 = memref.load %arg4[%c40] : memref<100xf32, #tpu.memory_space<smem>>
    %c41 = arith.constant 41 : index
    %71 = memref.load %arg4[%c41] : memref<100xf32, #tpu.memory_space<smem>>
    %c42 = arith.constant 42 : index
    %72 = memref.load %arg4[%c42] : memref<100xf32, #tpu.memory_space<smem>>
    %c43 = arith.constant 43 : index
    %73 = memref.load %arg4[%c43] : memref<100xf32, #tpu.memory_space<smem>>
    %c44 = arith.constant 44 : index
    %74 = memref.load %arg4[%c44] : memref<100xf32, #tpu.memory_space<smem>>
    %c45 = arith.constant 45 : index
    %75 = memref.load %arg4[%c45] : memref<100xf32, #tpu.memory_space<smem>>
    %c46 = arith.constant 46 : index
    %76 = memref.load %arg4[%c46] : memref<100xf32, #tpu.memory_space<smem>>
    %c47 = arith.constant 47 : index
    %77 = memref.load %arg4[%c47] : memref<100xf32, #tpu.memory_space<smem>>
    %c48 = arith.constant 48 : index
    %78 = memref.load %arg4[%c48] : memref<100xf32, #tpu.memory_space<smem>>
    %c49 = arith.constant 49 : index
    %79 = memref.load %arg4[%c49] : memref<100xf32, #tpu.memory_space<smem>>
    %c50 = arith.constant 50 : index
    %80 = memref.load %arg4[%c50] : memref<100xf32, #tpu.memory_space<smem>>
    %c51 = arith.constant 51 : index
    %81 = memref.load %arg4[%c51] : memref<100xf32, #tpu.memory_space<smem>>
    %c52 = arith.constant 52 : index
    %82 = memref.load %arg4[%c52] : memref<100xf32, #tpu.memory_space<smem>>
    %c53 = arith.constant 53 : index
    %83 = memref.load %arg4[%c53] : memref<100xf32, #tpu.memory_space<smem>>
    %c54 = arith.constant 54 : index
    %84 = memref.load %arg4[%c54] : memref<100xf32, #tpu.memory_space<smem>>
    %c55 = arith.constant 55 : index
    %85 = memref.load %arg4[%c55] : memref<100xf32, #tpu.memory_space<smem>>
    %c56 = arith.constant 56 : index
    %86 = memref.load %arg4[%c56] : memref<100xf32, #tpu.memory_space<smem>>
    %c57 = arith.constant 57 : index
    %87 = memref.load %arg4[%c57] : memref<100xf32, #tpu.memory_space<smem>>
    %c58 = arith.constant 58 : index
    %88 = memref.load %arg4[%c58] : memref<100xf32, #tpu.memory_space<smem>>
    %c59 = arith.constant 59 : index
    %89 = memref.load %arg4[%c59] : memref<100xf32, #tpu.memory_space<smem>>
    %c60 = arith.constant 60 : index
    %90 = memref.load %arg4[%c60] : memref<100xf32, #tpu.memory_space<smem>>
    %c61 = arith.constant 61 : index
    %91 = memref.load %arg4[%c61] : memref<100xf32, #tpu.memory_space<smem>>
    %c62 = arith.constant 62 : index
    %92 = memref.load %arg4[%c62] : memref<100xf32, #tpu.memory_space<smem>>
    %c63 = arith.constant 63 : index
    %93 = memref.load %arg4[%c63] : memref<100xf32, #tpu.memory_space<smem>>
    %c64 = arith.constant 64 : index
    %94 = memref.load %arg4[%c64] : memref<100xf32, #tpu.memory_space<smem>>
    %c65 = arith.constant 65 : index
    %95 = memref.load %arg4[%c65] : memref<100xf32, #tpu.memory_space<smem>>
    %c66 = arith.constant 66 : index
    %96 = memref.load %arg4[%c66] : memref<100xf32, #tpu.memory_space<smem>>
    %c67 = arith.constant 67 : index
    %97 = memref.load %arg4[%c67] : memref<100xf32, #tpu.memory_space<smem>>
    %c68 = arith.constant 68 : index
    %98 = memref.load %arg4[%c68] : memref<100xf32, #tpu.memory_space<smem>>
    %c69 = arith.constant 69 : index
    %99 = memref.load %arg4[%c69] : memref<100xf32, #tpu.memory_space<smem>>
    %c70 = arith.constant 70 : index
    %100 = memref.load %arg4[%c70] : memref<100xf32, #tpu.memory_space<smem>>
    %c71 = arith.constant 71 : index
    %101 = memref.load %arg4[%c71] : memref<100xf32, #tpu.memory_space<smem>>
    %c72 = arith.constant 72 : index
    %102 = memref.load %arg4[%c72] : memref<100xf32, #tpu.memory_space<smem>>
    %c73 = arith.constant 73 : index
    %103 = memref.load %arg4[%c73] : memref<100xf32, #tpu.memory_space<smem>>
    %c74 = arith.constant 74 : index
    %104 = memref.load %arg4[%c74] : memref<100xf32, #tpu.memory_space<smem>>
    %c75 = arith.constant 75 : index
    %105 = memref.load %arg4[%c75] : memref<100xf32, #tpu.memory_space<smem>>
    %c76 = arith.constant 76 : index
    %106 = memref.load %arg4[%c76] : memref<100xf32, #tpu.memory_space<smem>>
    %c77 = arith.constant 77 : index
    %107 = memref.load %arg4[%c77] : memref<100xf32, #tpu.memory_space<smem>>
    %c78 = arith.constant 78 : index
    %108 = memref.load %arg4[%c78] : memref<100xf32, #tpu.memory_space<smem>>
    %c79 = arith.constant 79 : index
    %109 = memref.load %arg4[%c79] : memref<100xf32, #tpu.memory_space<smem>>
    %c80 = arith.constant 80 : index
    %110 = memref.load %arg4[%c80] : memref<100xf32, #tpu.memory_space<smem>>
    %c81 = arith.constant 81 : index
    %111 = memref.load %arg4[%c81] : memref<100xf32, #tpu.memory_space<smem>>
    %c82 = arith.constant 82 : index
    %112 = memref.load %arg4[%c82] : memref<100xf32, #tpu.memory_space<smem>>
    %c83 = arith.constant 83 : index
    %113 = memref.load %arg4[%c83] : memref<100xf32, #tpu.memory_space<smem>>
    %c84 = arith.constant 84 : index
    %114 = memref.load %arg4[%c84] : memref<100xf32, #tpu.memory_space<smem>>
    %c85 = arith.constant 85 : index
    %115 = memref.load %arg4[%c85] : memref<100xf32, #tpu.memory_space<smem>>
    %c86 = arith.constant 86 : index
    %116 = memref.load %arg4[%c86] : memref<100xf32, #tpu.memory_space<smem>>
    %c87 = arith.constant 87 : index
    %117 = memref.load %arg4[%c87] : memref<100xf32, #tpu.memory_space<smem>>
    %c88 = arith.constant 88 : index
    %118 = memref.load %arg4[%c88] : memref<100xf32, #tpu.memory_space<smem>>
    %c89 = arith.constant 89 : index
    %119 = memref.load %arg4[%c89] : memref<100xf32, #tpu.memory_space<smem>>
    %c90 = arith.constant 90 : index
    %120 = memref.load %arg4[%c90] : memref<100xf32, #tpu.memory_space<smem>>
    %c91 = arith.constant 91 : index
    %121 = memref.load %arg4[%c91] : memref<100xf32, #tpu.memory_space<smem>>
    %c92 = arith.constant 92 : index
    %122 = memref.load %arg4[%c92] : memref<100xf32, #tpu.memory_space<smem>>
    %c93 = arith.constant 93 : index
    %123 = memref.load %arg4[%c93] : memref<100xf32, #tpu.memory_space<smem>>
    %c94 = arith.constant 94 : index
    %124 = memref.load %arg4[%c94] : memref<100xf32, #tpu.memory_space<smem>>
    %c95 = arith.constant 95 : index
    %125 = memref.load %arg4[%c95] : memref<100xf32, #tpu.memory_space<smem>>
    %c96 = arith.constant 96 : index
    %126 = memref.load %arg4[%c96] : memref<100xf32, #tpu.memory_space<smem>>
    %c97 = arith.constant 97 : index
    %127 = memref.load %arg4[%c97] : memref<100xf32, #tpu.memory_space<smem>>
    %c98 = arith.constant 98 : index
    %128 = memref.load %arg4[%c98] : memref<100xf32, #tpu.memory_space<smem>>
    %c99 = arith.constant 99 : index
    %129 = memref.load %arg4[%c99] : memref<100xf32, #tpu.memory_space<smem>>
    %c0_30 = arith.constant 0 : index
    %130 = memref.load %arg5[%c0_30] : memref<10xf32, #tpu.memory_space<smem>>
    %c1_31 = arith.constant 1 : index
    %131 = memref.load %arg5[%c1_31] : memref<10xf32, #tpu.memory_space<smem>>
    %c2_32 = arith.constant 2 : index
    %132 = memref.load %arg5[%c2_32] : memref<10xf32, #tpu.memory_space<smem>>
    %c3_33 = arith.constant 3 : index
    %133 = memref.load %arg5[%c3_33] : memref<10xf32, #tpu.memory_space<smem>>
    %c4_34 = arith.constant 4 : index
    %134 = memref.load %arg5[%c4_34] : memref<10xf32, #tpu.memory_space<smem>>
    %c5_35 = arith.constant 5 : index
    %135 = memref.load %arg5[%c5_35] : memref<10xf32, #tpu.memory_space<smem>>
    %c6_36 = arith.constant 6 : index
    %136 = memref.load %arg5[%c6_36] : memref<10xf32, #tpu.memory_space<smem>>
    %c7_37 = arith.constant 7 : index
    %137 = memref.load %arg5[%c7_37] : memref<10xf32, #tpu.memory_space<smem>>
    %c8_38 = arith.constant 8 : index
    %138 = memref.load %arg5[%c8_38] : memref<10xf32, #tpu.memory_space<smem>>
    %c9_39 = arith.constant 9 : index
    %139 = memref.load %arg5[%c9_39] : memref<10xf32, #tpu.memory_space<smem>>
    %c0_40 = arith.constant 0 : index
    %140 = memref.load %arg6[%c0_40] : memref<10xf32, #tpu.memory_space<smem>>
    %c1_41 = arith.constant 1 : index
    %141 = memref.load %arg6[%c1_41] : memref<10xf32, #tpu.memory_space<smem>>
    %c2_42 = arith.constant 2 : index
    %142 = memref.load %arg6[%c2_42] : memref<10xf32, #tpu.memory_space<smem>>
    %c3_43 = arith.constant 3 : index
    %143 = memref.load %arg6[%c3_43] : memref<10xf32, #tpu.memory_space<smem>>
    %c4_44 = arith.constant 4 : index
    %144 = memref.load %arg6[%c4_44] : memref<10xf32, #tpu.memory_space<smem>>
    %c5_45 = arith.constant 5 : index
    %145 = memref.load %arg6[%c5_45] : memref<10xf32, #tpu.memory_space<smem>>
    %c6_46 = arith.constant 6 : index
    %146 = memref.load %arg6[%c6_46] : memref<10xf32, #tpu.memory_space<smem>>
    %c7_47 = arith.constant 7 : index
    %147 = memref.load %arg6[%c7_47] : memref<10xf32, #tpu.memory_space<smem>>
    %c8_48 = arith.constant 8 : index
    %148 = memref.load %arg6[%c8_48] : memref<10xf32, #tpu.memory_space<smem>>
    %c9_49 = arith.constant 9 : index
    %149 = memref.load %arg6[%c9_49] : memref<10xf32, #tpu.memory_space<smem>>
    %c0_50 = arith.constant 0 : index
    %150 = memref.load %arg7[%c0_50] : memref<1xf32, #tpu.memory_space<smem>>
    %c0_i32 = arith.constant 0 : i32
    %c8_i32 = arith.constant 8 : i32
    %151 = arith.muli %c0_i32, %c8_i32 : i32
    %152 = tpu.assume_multiple %151, 8 : i32
    %c0_51 = arith.constant 0 : index
    %153 = arith.index_cast %152 : i32 to index
    %c0_52 = arith.constant 0 : index
    %154 = vector.load %arg1[%c0_51, %153, %c0_52] : memref<2x8x128xf32, #tpu.memory_space<vmem>>, vector<1x8x128xf32>
    %155 = vector.shape_cast %154 : vector<1x8x128xf32> to vector<8x128xf32>
    %c1_53 = arith.constant 1 : index
    %156 = arith.index_cast %152 : i32 to index
    %c0_54 = arith.constant 0 : index
    %157 = vector.load %arg1[%c1_53, %156, %c0_54] : memref<2x8x128xf32, #tpu.memory_space<vmem>>, vector<1x8x128xf32>
    %158 = vector.shape_cast %157 : vector<1x8x128xf32> to vector<8x128xf32>
    %159 = vector.broadcast %0 : f32 to vector<8x128xf32>
    %160 = arith.mulf %159, %155 : vector<8x128xf32>
    %161 = vector.broadcast %1 : f32 to vector<8x128xf32>
    %162 = arith.mulf %161, %158 : vector<8x128xf32>
    %163 = arith.addf %160, %162 : vector<8x128xf32>
    %164 = vector.broadcast %20 : f32 to vector<8x128xf32>
    %165 = arith.addf %163, %164 : vector<8x128xf32>
    %cst = arith.constant 0.000000e+00 : f32
    %166 = vector.broadcast %cst : f32 to vector<8x128xf32>
    %167 = arith.maximumf %165, %166 : vector<8x128xf32>
    %168 = vector.broadcast %2 : f32 to vector<8x128xf32>
    %169 = arith.mulf %168, %155 : vector<8x128xf32>
    %170 = vector.broadcast %3 : f32 to vector<8x128xf32>
    %171 = arith.mulf %170, %158 : vector<8x128xf32>
    %172 = arith.addf %169, %171 : vector<8x128xf32>
    %173 = vector.broadcast %21 : f32 to vector<8x128xf32>
    %174 = arith.addf %172, %173 : vector<8x128xf32>
    %cst_55 = arith.constant 0.000000e+00 : f32
    %175 = vector.broadcast %cst_55 : f32 to vector<8x128xf32>
    %176 = arith.maximumf %174, %175 : vector<8x128xf32>
    %177 = vector.broadcast %4 : f32 to vector<8x128xf32>
    %178 = arith.mulf %177, %155 : vector<8x128xf32>
    %179 = vector.broadcast %5 : f32 to vector<8x128xf32>
    %180 = arith.mulf %179, %158 : vector<8x128xf32>
    %181 = arith.addf %178, %180 : vector<8x128xf32>
    %182 = vector.broadcast %22 : f32 to vector<8x128xf32>
    %183 = arith.addf %181, %182 : vector<8x128xf32>
    %cst_56 = arith.constant 0.000000e+00 : f32
    %184 = vector.broadcast %cst_56 : f32 to vector<8x128xf32>
    %185 = arith.maximumf %183, %184 : vector<8x128xf32>
    %186 = vector.broadcast %6 : f32 to vector<8x128xf32>
    %187 = arith.mulf %186, %155 : vector<8x128xf32>
    %188 = vector.broadcast %7 : f32 to vector<8x128xf32>
    %189 = arith.mulf %188, %158 : vector<8x128xf32>
    %190 = arith.addf %187, %189 : vector<8x128xf32>
    %191 = vector.broadcast %23 : f32 to vector<8x128xf32>
    %192 = arith.addf %190, %191 : vector<8x128xf32>
    %cst_57 = arith.constant 0.000000e+00 : f32
    %193 = vector.broadcast %cst_57 : f32 to vector<8x128xf32>
    %194 = arith.maximumf %192, %193 : vector<8x128xf32>
    %195 = vector.broadcast %8 : f32 to vector<8x128xf32>
    %196 = arith.mulf %195, %155 : vector<8x128xf32>
    %197 = vector.broadcast %9 : f32 to vector<8x128xf32>
    %198 = arith.mulf %197, %158 : vector<8x128xf32>
    %199 = arith.addf %196, %198 : vector<8x128xf32>
    %200 = vector.broadcast %24 : f32 to vector<8x128xf32>
    %201 = arith.addf %199, %200 : vector<8x128xf32>
    %cst_58 = arith.constant 0.000000e+00 : f32
    %202 = vector.broadcast %cst_58 : f32 to vector<8x128xf32>
    %203 = arith.maximumf %201, %202 : vector<8x128xf32>
    %204 = vector.broadcast %10 : f32 to vector<8x128xf32>
    %205 = arith.mulf %204, %155 : vector<8x128xf32>
    %206 = vector.broadcast %11 : f32 to vector<8x128xf32>
    %207 = arith.mulf %206, %158 : vector<8x128xf32>
    %208 = arith.addf %205, %207 : vector<8x128xf32>
    %209 = vector.broadcast %25 : f32 to vector<8x128xf32>
    %210 = arith.addf %208, %209 : vector<8x128xf32>
    %cst_59 = arith.constant 0.000000e+00 : f32
    %211 = vector.broadcast %cst_59 : f32 to vector<8x128xf32>
    %212 = arith.maximumf %210, %211 : vector<8x128xf32>
    %213 = vector.broadcast %12 : f32 to vector<8x128xf32>
    %214 = arith.mulf %213, %155 : vector<8x128xf32>
    %215 = vector.broadcast %13 : f32 to vector<8x128xf32>
    %216 = arith.mulf %215, %158 : vector<8x128xf32>
    %217 = arith.addf %214, %216 : vector<8x128xf32>
    %218 = vector.broadcast %26 : f32 to vector<8x128xf32>
    %219 = arith.addf %217, %218 : vector<8x128xf32>
    %cst_60 = arith.constant 0.000000e+00 : f32
    %220 = vector.broadcast %cst_60 : f32 to vector<8x128xf32>
    %221 = arith.maximumf %219, %220 : vector<8x128xf32>
    %222 = vector.broadcast %14 : f32 to vector<8x128xf32>
    %223 = arith.mulf %222, %155 : vector<8x128xf32>
    %224 = vector.broadcast %15 : f32 to vector<8x128xf32>
    %225 = arith.mulf %224, %158 : vector<8x128xf32>
    %226 = arith.addf %223, %225 : vector<8x128xf32>
    %227 = vector.broadcast %27 : f32 to vector<8x128xf32>
    %228 = arith.addf %226, %227 : vector<8x128xf32>
    %cst_61 = arith.constant 0.000000e+00 : f32
    %229 = vector.broadcast %cst_61 : f32 to vector<8x128xf32>
    %230 = arith.maximumf %228, %229 : vector<8x128xf32>
    %231 = vector.broadcast %16 : f32 to vector<8x128xf32>
    %232 = arith.mulf %231, %155 : vector<8x128xf32>
    %233 = vector.broadcast %17 : f32 to vector<8x128xf32>
    %234 = arith.mulf %233, %158 : vector<8x128xf32>
    %235 = arith.addf %232, %234 : vector<8x128xf32>
    %236 = vector.broadcast %28 : f32 to vector<8x128xf32>
    %237 = arith.addf %235, %236 : vector<8x128xf32>
    %cst_62 = arith.constant 0.000000e+00 : f32
    %238 = vector.broadcast %cst_62 : f32 to vector<8x128xf32>
    %239 = arith.maximumf %237, %238 : vector<8x128xf32>
    %240 = vector.broadcast %18 : f32 to vector<8x128xf32>
    %241 = arith.mulf %240, %155 : vector<8x128xf32>
    %242 = vector.broadcast %19 : f32 to vector<8x128xf32>
    %243 = arith.mulf %242, %158 : vector<8x128xf32>
    %244 = arith.addf %241, %243 : vector<8x128xf32>
    %245 = vector.broadcast %29 : f32 to vector<8x128xf32>
    %246 = arith.addf %244, %245 : vector<8x128xf32>
    %cst_63 = arith.constant 0.000000e+00 : f32
    %247 = vector.broadcast %cst_63 : f32 to vector<8x128xf32>
    %248 = arith.maximumf %246, %247 : vector<8x128xf32>
    %249 = vector.broadcast %30 : f32 to vector<8x128xf32>
    %250 = arith.mulf %249, %167 : vector<8x128xf32>
    %251 = vector.broadcast %31 : f32 to vector<8x128xf32>
    %252 = arith.mulf %251, %176 : vector<8x128xf32>
    %253 = arith.addf %250, %252 : vector<8x128xf32>
    %254 = vector.broadcast %32 : f32 to vector<8x128xf32>
    %255 = arith.mulf %254, %185 : vector<8x128xf32>
    %256 = arith.addf %253, %255 : vector<8x128xf32>
    %257 = vector.broadcast %33 : f32 to vector<8x128xf32>
    %258 = arith.mulf %257, %194 : vector<8x128xf32>
    %259 = arith.addf %256, %258 : vector<8x128xf32>
    %260 = vector.broadcast %34 : f32 to vector<8x128xf32>
    %261 = arith.mulf %260, %203 : vector<8x128xf32>
    %262 = arith.addf %259, %261 : vector<8x128xf32>
    %263 = vector.broadcast %35 : f32 to vector<8x128xf32>
    %264 = arith.mulf %263, %212 : vector<8x128xf32>
    %265 = arith.addf %262, %264 : vector<8x128xf32>
    %266 = vector.broadcast %36 : f32 to vector<8x128xf32>
    %267 = arith.mulf %266, %221 : vector<8x128xf32>
    %268 = arith.addf %265, %267 : vector<8x128xf32>
    %269 = vector.broadcast %37 : f32 to vector<8x128xf32>
    %270 = arith.mulf %269, %230 : vector<8x128xf32>
    %271 = arith.addf %268, %270 : vector<8x128xf32>
    %272 = vector.broadcast %38 : f32 to vector<8x128xf32>
    %273 = arith.mulf %272, %239 : vector<8x128xf32>
    %274 = arith.addf %271, %273 : vector<8x128xf32>
    %275 = vector.broadcast %39 : f32 to vector<8x128xf32>
    %276 = arith.mulf %275, %248 : vector<8x128xf32>
    %277 = arith.addf %274, %276 : vector<8x128xf32>
    %278 = vector.broadcast %130 : f32 to vector<8x128xf32>
    %279 = arith.addf %277, %278 : vector<8x128xf32>
    %cst_64 = arith.constant 0.000000e+00 : f32
    %280 = vector.broadcast %cst_64 : f32 to vector<8x128xf32>
    %281 = arith.maximumf %279, %280 : vector<8x128xf32>
    %282 = vector.broadcast %40 : f32 to vector<8x128xf32>
    %283 = arith.mulf %282, %167 : vector<8x128xf32>
    %284 = vector.broadcast %41 : f32 to vector<8x128xf32>
    %285 = arith.mulf %284, %176 : vector<8x128xf32>
    %286 = arith.addf %283, %285 : vector<8x128xf32>
    %287 = vector.broadcast %42 : f32 to vector<8x128xf32>
    %288 = arith.mulf %287, %185 : vector<8x128xf32>
    %289 = arith.addf %286, %288 : vector<8x128xf32>
    %290 = vector.broadcast %43 : f32 to vector<8x128xf32>
    %291 = arith.mulf %290, %194 : vector<8x128xf32>
    %292 = arith.addf %289, %291 : vector<8x128xf32>
    %293 = vector.broadcast %44 : f32 to vector<8x128xf32>
    %294 = arith.mulf %293, %203 : vector<8x128xf32>
    %295 = arith.addf %292, %294 : vector<8x128xf32>
    %296 = vector.broadcast %45 : f32 to vector<8x128xf32>
    %297 = arith.mulf %296, %212 : vector<8x128xf32>
    %298 = arith.addf %295, %297 : vector<8x128xf32>
    %299 = vector.broadcast %46 : f32 to vector<8x128xf32>
    %300 = arith.mulf %299, %221 : vector<8x128xf32>
    %301 = arith.addf %298, %300 : vector<8x128xf32>
    %302 = vector.broadcast %47 : f32 to vector<8x128xf32>
    %303 = arith.mulf %302, %230 : vector<8x128xf32>
    %304 = arith.addf %301, %303 : vector<8x128xf32>
    %305 = vector.broadcast %48 : f32 to vector<8x128xf32>
    %306 = arith.mulf %305, %239 : vector<8x128xf32>
    %307 = arith.addf %304, %306 : vector<8x128xf32>
    %308 = vector.broadcast %49 : f32 to vector<8x128xf32>
    %309 = arith.mulf %308, %248 : vector<8x128xf32>
    %310 = arith.addf %307, %309 : vector<8x128xf32>
    %311 = vector.broadcast %131 : f32 to vector<8x128xf32>
    %312 = arith.addf %310, %311 : vector<8x128xf32>
    %cst_65 = arith.constant 0.000000e+00 : f32
    %313 = vector.broadcast %cst_65 : f32 to vector<8x128xf32>
    %314 = arith.maximumf %312, %313 : vector<8x128xf32>
    %315 = vector.broadcast %50 : f32 to vector<8x128xf32>
    %316 = arith.mulf %315, %167 : vector<8x128xf32>
    %317 = vector.broadcast %51 : f32 to vector<8x128xf32>
    %318 = arith.mulf %317, %176 : vector<8x128xf32>
    %319 = arith.addf %316, %318 : vector<8x128xf32>
    %320 = vector.broadcast %52 : f32 to vector<8x128xf32>
    %321 = arith.mulf %320, %185 : vector<8x128xf32>
    %322 = arith.addf %319, %321 : vector<8x128xf32>
    %323 = vector.broadcast %53 : f32 to vector<8x128xf32>
    %324 = arith.mulf %323, %194 : vector<8x128xf32>
    %325 = arith.addf %322, %324 : vector<8x128xf32>
    %326 = vector.broadcast %54 : f32 to vector<8x128xf32>
    %327 = arith.mulf %326, %203 : vector<8x128xf32>
    %328 = arith.addf %325, %327 : vector<8x128xf32>
    %329 = vector.broadcast %55 : f32 to vector<8x128xf32>
    %330 = arith.mulf %329, %212 : vector<8x128xf32>
    %331 = arith.addf %328, %330 : vector<8x128xf32>
    %332 = vector.broadcast %56 : f32 to vector<8x128xf32>
    %333 = arith.mulf %332, %221 : vector<8x128xf32>
    %334 = arith.addf %331, %333 : vector<8x128xf32>
    %335 = vector.broadcast %57 : f32 to vector<8x128xf32>
    %336 = arith.mulf %335, %230 : vector<8x128xf32>
    %337 = arith.addf %334, %336 : vector<8x128xf32>
    %338 = vector.broadcast %58 : f32 to vector<8x128xf32>
    %339 = arith.mulf %338, %239 : vector<8x128xf32>
    %340 = arith.addf %337, %339 : vector<8x128xf32>
    %341 = vector.broadcast %59 : f32 to vector<8x128xf32>
    %342 = arith.mulf %341, %248 : vector<8x128xf32>
    %343 = arith.addf %340, %342 : vector<8x128xf32>
    %344 = vector.broadcast %132 : f32 to vector<8x128xf32>
    %345 = arith.addf %343, %344 : vector<8x128xf32>
    %cst_66 = arith.constant 0.000000e+00 : f32
    %346 = vector.broadcast %cst_66 : f32 to vector<8x128xf32>
    %347 = arith.maximumf %345, %346 : vector<8x128xf32>
    %348 = vector.broadcast %60 : f32 to vector<8x128xf32>
    %349 = arith.mulf %348, %167 : vector<8x128xf32>
    %350 = vector.broadcast %61 : f32 to vector<8x128xf32>
    %351 = arith.mulf %350, %176 : vector<8x128xf32>
    %352 = arith.addf %349, %351 : vector<8x128xf32>
    %353 = vector.broadcast %62 : f32 to vector<8x128xf32>
    %354 = arith.mulf %353, %185 : vector<8x128xf32>
    %355 = arith.addf %352, %354 : vector<8x128xf32>
    %356 = vector.broadcast %63 : f32 to vector<8x128xf32>
    %357 = arith.mulf %356, %194 : vector<8x128xf32>
    %358 = arith.addf %355, %357 : vector<8x128xf32>
    %359 = vector.broadcast %64 : f32 to vector<8x128xf32>
    %360 = arith.mulf %359, %203 : vector<8x128xf32>
    %361 = arith.addf %358, %360 : vector<8x128xf32>
    %362 = vector.broadcast %65 : f32 to vector<8x128xf32>
    %363 = arith.mulf %362, %212 : vector<8x128xf32>
    %364 = arith.addf %361, %363 : vector<8x128xf32>
    %365 = vector.broadcast %66 : f32 to vector<8x128xf32>
    %366 = arith.mulf %365, %221 : vector<8x128xf32>
    %367 = arith.addf %364, %366 : vector<8x128xf32>
    %368 = vector.broadcast %67 : f32 to vector<8x128xf32>
    %369 = arith.mulf %368, %230 : vector<8x128xf32>
    %370 = arith.addf %367, %369 : vector<8x128xf32>
    %371 = vector.broadcast %68 : f32 to vector<8x128xf32>
    %372 = arith.mulf %371, %239 : vector<8x128xf32>
    %373 = arith.addf %370, %372 : vector<8x128xf32>
    %374 = vector.broadcast %69 : f32 to vector<8x128xf32>
    %375 = arith.mulf %374, %248 : vector<8x128xf32>
    %376 = arith.addf %373, %375 : vector<8x128xf32>
    %377 = vector.broadcast %133 : f32 to vector<8x128xf32>
    %378 = arith.addf %376, %377 : vector<8x128xf32>
    %cst_67 = arith.constant 0.000000e+00 : f32
    %379 = vector.broadcast %cst_67 : f32 to vector<8x128xf32>
    %380 = arith.maximumf %378, %379 : vector<8x128xf32>
    %381 = vector.broadcast %70 : f32 to vector<8x128xf32>
    %382 = arith.mulf %381, %167 : vector<8x128xf32>
    %383 = vector.broadcast %71 : f32 to vector<8x128xf32>
    %384 = arith.mulf %383, %176 : vector<8x128xf32>
    %385 = arith.addf %382, %384 : vector<8x128xf32>
    %386 = vector.broadcast %72 : f32 to vector<8x128xf32>
    %387 = arith.mulf %386, %185 : vector<8x128xf32>
    %388 = arith.addf %385, %387 : vector<8x128xf32>
    %389 = vector.broadcast %73 : f32 to vector<8x128xf32>
    %390 = arith.mulf %389, %194 : vector<8x128xf32>
    %391 = arith.addf %388, %390 : vector<8x128xf32>
    %392 = vector.broadcast %74 : f32 to vector<8x128xf32>
    %393 = arith.mulf %392, %203 : vector<8x128xf32>
    %394 = arith.addf %391, %393 : vector<8x128xf32>
    %395 = vector.broadcast %75 : f32 to vector<8x128xf32>
    %396 = arith.mulf %395, %212 : vector<8x128xf32>
    %397 = arith.addf %394, %396 : vector<8x128xf32>
    %398 = vector.broadcast %76 : f32 to vector<8x128xf32>
    %399 = arith.mulf %398, %221 : vector<8x128xf32>
    %400 = arith.addf %397, %399 : vector<8x128xf32>
    %401 = vector.broadcast %77 : f32 to vector<8x128xf32>
    %402 = arith.mulf %401, %230 : vector<8x128xf32>
    %403 = arith.addf %400, %402 : vector<8x128xf32>
    %404 = vector.broadcast %78 : f32 to vector<8x128xf32>
    %405 = arith.mulf %404, %239 : vector<8x128xf32>
    %406 = arith.addf %403, %405 : vector<8x128xf32>
    %407 = vector.broadcast %79 : f32 to vector<8x128xf32>
    %408 = arith.mulf %407, %248 : vector<8x128xf32>
    %409 = arith.addf %406, %408 : vector<8x128xf32>
    %410 = vector.broadcast %134 : f32 to vector<8x128xf32>
    %411 = arith.addf %409, %410 : vector<8x128xf32>
    %cst_68 = arith.constant 0.000000e+00 : f32
    %412 = vector.broadcast %cst_68 : f32 to vector<8x128xf32>
    %413 = arith.maximumf %411, %412 : vector<8x128xf32>
    %414 = vector.broadcast %80 : f32 to vector<8x128xf32>
    %415 = arith.mulf %414, %167 : vector<8x128xf32>
    %416 = vector.broadcast %81 : f32 to vector<8x128xf32>
    %417 = arith.mulf %416, %176 : vector<8x128xf32>
    %418 = arith.addf %415, %417 : vector<8x128xf32>
    %419 = vector.broadcast %82 : f32 to vector<8x128xf32>
    %420 = arith.mulf %419, %185 : vector<8x128xf32>
    %421 = arith.addf %418, %420 : vector<8x128xf32>
    %422 = vector.broadcast %83 : f32 to vector<8x128xf32>
    %423 = arith.mulf %422, %194 : vector<8x128xf32>
    %424 = arith.addf %421, %423 : vector<8x128xf32>
    %425 = vector.broadcast %84 : f32 to vector<8x128xf32>
    %426 = arith.mulf %425, %203 : vector<8x128xf32>
    %427 = arith.addf %424, %426 : vector<8x128xf32>
    %428 = vector.broadcast %85 : f32 to vector<8x128xf32>
    %429 = arith.mulf %428, %212 : vector<8x128xf32>
    %430 = arith.addf %427, %429 : vector<8x128xf32>
    %431 = vector.broadcast %86 : f32 to vector<8x128xf32>
    %432 = arith.mulf %431, %221 : vector<8x128xf32>
    %433 = arith.addf %430, %432 : vector<8x128xf32>
    %434 = vector.broadcast %87 : f32 to vector<8x128xf32>
    %435 = arith.mulf %434, %230 : vector<8x128xf32>
    %436 = arith.addf %433, %435 : vector<8x128xf32>
    %437 = vector.broadcast %88 : f32 to vector<8x128xf32>
    %438 = arith.mulf %437, %239 : vector<8x128xf32>
    %439 = arith.addf %436, %438 : vector<8x128xf32>
    %440 = vector.broadcast %89 : f32 to vector<8x128xf32>
    %441 = arith.mulf %440, %248 : vector<8x128xf32>
    %442 = arith.addf %439, %441 : vector<8x128xf32>
    %443 = vector.broadcast %135 : f32 to vector<8x128xf32>
    %444 = arith.addf %442, %443 : vector<8x128xf32>
    %cst_69 = arith.constant 0.000000e+00 : f32
    %445 = vector.broadcast %cst_69 : f32 to vector<8x128xf32>
    %446 = arith.maximumf %444, %445 : vector<8x128xf32>
    %447 = vector.broadcast %90 : f32 to vector<8x128xf32>
    %448 = arith.mulf %447, %167 : vector<8x128xf32>
    %449 = vector.broadcast %91 : f32 to vector<8x128xf32>
    %450 = arith.mulf %449, %176 : vector<8x128xf32>
    %451 = arith.addf %448, %450 : vector<8x128xf32>
    %452 = vector.broadcast %92 : f32 to vector<8x128xf32>
    %453 = arith.mulf %452, %185 : vector<8x128xf32>
    %454 = arith.addf %451, %453 : vector<8x128xf32>
    %455 = vector.broadcast %93 : f32 to vector<8x128xf32>
    %456 = arith.mulf %455, %194 : vector<8x128xf32>
    %457 = arith.addf %454, %456 : vector<8x128xf32>
    %458 = vector.broadcast %94 : f32 to vector<8x128xf32>
    %459 = arith.mulf %458, %203 : vector<8x128xf32>
    %460 = arith.addf %457, %459 : vector<8x128xf32>
    %461 = vector.broadcast %95 : f32 to vector<8x128xf32>
    %462 = arith.mulf %461, %212 : vector<8x128xf32>
    %463 = arith.addf %460, %462 : vector<8x128xf32>
    %464 = vector.broadcast %96 : f32 to vector<8x128xf32>
    %465 = arith.mulf %464, %221 : vector<8x128xf32>
    %466 = arith.addf %463, %465 : vector<8x128xf32>
    %467 = vector.broadcast %97 : f32 to vector<8x128xf32>
    %468 = arith.mulf %467, %230 : vector<8x128xf32>
    %469 = arith.addf %466, %468 : vector<8x128xf32>
    %470 = vector.broadcast %98 : f32 to vector<8x128xf32>
    %471 = arith.mulf %470, %239 : vector<8x128xf32>
    %472 = arith.addf %469, %471 : vector<8x128xf32>
    %473 = vector.broadcast %99 : f32 to vector<8x128xf32>
    %474 = arith.mulf %473, %248 : vector<8x128xf32>
    %475 = arith.addf %472, %474 : vector<8x128xf32>
    %476 = vector.broadcast %136 : f32 to vector<8x128xf32>
    %477 = arith.addf %475, %476 : vector<8x128xf32>
    %cst_70 = arith.constant 0.000000e+00 : f32
    %478 = vector.broadcast %cst_70 : f32 to vector<8x128xf32>
    %479 = arith.maximumf %477, %478 : vector<8x128xf32>
    %480 = vector.broadcast %100 : f32 to vector<8x128xf32>
    %481 = arith.mulf %480, %167 : vector<8x128xf32>
    %482 = vector.broadcast %101 : f32 to vector<8x128xf32>
    %483 = arith.mulf %482, %176 : vector<8x128xf32>
    %484 = arith.addf %481, %483 : vector<8x128xf32>
    %485 = vector.broadcast %102 : f32 to vector<8x128xf32>
    %486 = arith.mulf %485, %185 : vector<8x128xf32>
    %487 = arith.addf %484, %486 : vector<8x128xf32>
    %488 = vector.broadcast %103 : f32 to vector<8x128xf32>
    %489 = arith.mulf %488, %194 : vector<8x128xf32>
    %490 = arith.addf %487, %489 : vector<8x128xf32>
    %491 = vector.broadcast %104 : f32 to vector<8x128xf32>
    %492 = arith.mulf %491, %203 : vector<8x128xf32>
    %493 = arith.addf %490, %492 : vector<8x128xf32>
    %494 = vector.broadcast %105 : f32 to vector<8x128xf32>
    %495 = arith.mulf %494, %212 : vector<8x128xf32>
    %496 = arith.addf %493, %495 : vector<8x128xf32>
    %497 = vector.broadcast %106 : f32 to vector<8x128xf32>
    %498 = arith.mulf %497, %221 : vector<8x128xf32>
    %499 = arith.addf %496, %498 : vector<8x128xf32>
    %500 = vector.broadcast %107 : f32 to vector<8x128xf32>
    %501 = arith.mulf %500, %230 : vector<8x128xf32>
    %502 = arith.addf %499, %501 : vector<8x128xf32>
    %503 = vector.broadcast %108 : f32 to vector<8x128xf32>
    %504 = arith.mulf %503, %239 : vector<8x128xf32>
    %505 = arith.addf %502, %504 : vector<8x128xf32>
    %506 = vector.broadcast %109 : f32 to vector<8x128xf32>
    %507 = arith.mulf %506, %248 : vector<8x128xf32>
    %508 = arith.addf %505, %507 : vector<8x128xf32>
    %509 = vector.broadcast %137 : f32 to vector<8x128xf32>
    %510 = arith.addf %508, %509 : vector<8x128xf32>
    %cst_71 = arith.constant 0.000000e+00 : f32
    %511 = vector.broadcast %cst_71 : f32 to vector<8x128xf32>
    %512 = arith.maximumf %510, %511 : vector<8x128xf32>
    %513 = vector.broadcast %110 : f32 to vector<8x128xf32>
    %514 = arith.mulf %513, %167 : vector<8x128xf32>
    %515 = vector.broadcast %111 : f32 to vector<8x128xf32>
    %516 = arith.mulf %515, %176 : vector<8x128xf32>
    %517 = arith.addf %514, %516 : vector<8x128xf32>
    %518 = vector.broadcast %112 : f32 to vector<8x128xf32>
    %519 = arith.mulf %518, %185 : vector<8x128xf32>
    %520 = arith.addf %517, %519 : vector<8x128xf32>
    %521 = vector.broadcast %113 : f32 to vector<8x128xf32>
    %522 = arith.mulf %521, %194 : vector<8x128xf32>
    %523 = arith.addf %520, %522 : vector<8x128xf32>
    %524 = vector.broadcast %114 : f32 to vector<8x128xf32>
    %525 = arith.mulf %524, %203 : vector<8x128xf32>
    %526 = arith.addf %523, %525 : vector<8x128xf32>
    %527 = vector.broadcast %115 : f32 to vector<8x128xf32>
    %528 = arith.mulf %527, %212 : vector<8x128xf32>
    %529 = arith.addf %526, %528 : vector<8x128xf32>
    %530 = vector.broadcast %116 : f32 to vector<8x128xf32>
    %531 = arith.mulf %530, %221 : vector<8x128xf32>
    %532 = arith.addf %529, %531 : vector<8x128xf32>
    %533 = vector.broadcast %117 : f32 to vector<8x128xf32>
    %534 = arith.mulf %533, %230 : vector<8x128xf32>
    %535 = arith.addf %532, %534 : vector<8x128xf32>
    %536 = vector.broadcast %118 : f32 to vector<8x128xf32>
    %537 = arith.mulf %536, %239 : vector<8x128xf32>
    %538 = arith.addf %535, %537 : vector<8x128xf32>
    %539 = vector.broadcast %119 : f32 to vector<8x128xf32>
    %540 = arith.mulf %539, %248 : vector<8x128xf32>
    %541 = arith.addf %538, %540 : vector<8x128xf32>
    %542 = vector.broadcast %138 : f32 to vector<8x128xf32>
    %543 = arith.addf %541, %542 : vector<8x128xf32>
    %cst_72 = arith.constant 0.000000e+00 : f32
    %544 = vector.broadcast %cst_72 : f32 to vector<8x128xf32>
    %545 = arith.maximumf %543, %544 : vector<8x128xf32>
    %546 = vector.broadcast %120 : f32 to vector<8x128xf32>
    %547 = arith.mulf %546, %167 : vector<8x128xf32>
    %548 = vector.broadcast %121 : f32 to vector<8x128xf32>
    %549 = arith.mulf %548, %176 : vector<8x128xf32>
    %550 = arith.addf %547, %549 : vector<8x128xf32>
    %551 = vector.broadcast %122 : f32 to vector<8x128xf32>
    %552 = arith.mulf %551, %185 : vector<8x128xf32>
    %553 = arith.addf %550, %552 : vector<8x128xf32>
    %554 = vector.broadcast %123 : f32 to vector<8x128xf32>
    %555 = arith.mulf %554, %194 : vector<8x128xf32>
    %556 = arith.addf %553, %555 : vector<8x128xf32>
    %557 = vector.broadcast %124 : f32 to vector<8x128xf32>
    %558 = arith.mulf %557, %203 : vector<8x128xf32>
    %559 = arith.addf %556, %558 : vector<8x128xf32>
    %560 = vector.broadcast %125 : f32 to vector<8x128xf32>
    %561 = arith.mulf %560, %212 : vector<8x128xf32>
    %562 = arith.addf %559, %561 : vector<8x128xf32>
    %563 = vector.broadcast %126 : f32 to vector<8x128xf32>
    %564 = arith.mulf %563, %221 : vector<8x128xf32>
    %565 = arith.addf %562, %564 : vector<8x128xf32>
    %566 = vector.broadcast %127 : f32 to vector<8x128xf32>
    %567 = arith.mulf %566, %230 : vector<8x128xf32>
    %568 = arith.addf %565, %567 : vector<8x128xf32>
    %569 = vector.broadcast %128 : f32 to vector<8x128xf32>
    %570 = arith.mulf %569, %239 : vector<8x128xf32>
    %571 = arith.addf %568, %570 : vector<8x128xf32>
    %572 = vector.broadcast %129 : f32 to vector<8x128xf32>
    %573 = arith.mulf %572, %248 : vector<8x128xf32>
    %574 = arith.addf %571, %573 : vector<8x128xf32>
    %575 = vector.broadcast %139 : f32 to vector<8x128xf32>
    %576 = arith.addf %574, %575 : vector<8x128xf32>
    %cst_73 = arith.constant 0.000000e+00 : f32
    %577 = vector.broadcast %cst_73 : f32 to vector<8x128xf32>
    %578 = arith.maximumf %576, %577 : vector<8x128xf32>
    %579 = vector.broadcast %140 : f32 to vector<8x128xf32>
    %580 = arith.mulf %579, %281 : vector<8x128xf32>
    %581 = vector.broadcast %141 : f32 to vector<8x128xf32>
    %582 = arith.mulf %581, %314 : vector<8x128xf32>
    %583 = arith.addf %580, %582 : vector<8x128xf32>
    %584 = vector.broadcast %142 : f32 to vector<8x128xf32>
    %585 = arith.mulf %584, %347 : vector<8x128xf32>
    %586 = arith.addf %583, %585 : vector<8x128xf32>
    %587 = vector.broadcast %143 : f32 to vector<8x128xf32>
    %588 = arith.mulf %587, %380 : vector<8x128xf32>
    %589 = arith.addf %586, %588 : vector<8x128xf32>
    %590 = vector.broadcast %144 : f32 to vector<8x128xf32>
    %591 = arith.mulf %590, %413 : vector<8x128xf32>
    %592 = arith.addf %589, %591 : vector<8x128xf32>
    %593 = vector.broadcast %145 : f32 to vector<8x128xf32>
    %594 = arith.mulf %593, %446 : vector<8x128xf32>
    %595 = arith.addf %592, %594 : vector<8x128xf32>
    %596 = vector.broadcast %146 : f32 to vector<8x128xf32>
    %597 = arith.mulf %596, %479 : vector<8x128xf32>
    %598 = arith.addf %595, %597 : vector<8x128xf32>
    %599 = vector.broadcast %147 : f32 to vector<8x128xf32>
    %600 = arith.mulf %599, %512 : vector<8x128xf32>
    %601 = arith.addf %598, %600 : vector<8x128xf32>
    %602 = vector.broadcast %148 : f32 to vector<8x128xf32>
    %603 = arith.mulf %602, %545 : vector<8x128xf32>
    %604 = arith.addf %601, %603 : vector<8x128xf32>
    %605 = vector.broadcast %149 : f32 to vector<8x128xf32>
    %606 = arith.mulf %605, %578 : vector<8x128xf32>
    %607 = arith.addf %604, %606 : vector<8x128xf32>
    %608 = vector.broadcast %150 : f32 to vector<8x128xf32>
    %609 = arith.addf %607, %608 : vector<8x128xf32>
    %610 = arith.index_cast %152 : i32 to index
    %c0_74 = arith.constant 0 : index
    %611 = vector.load %arg8[%610, %c0_74] : memref<8x128xf32, #tpu.memory_space<vmem>>, vector<8x128xf32>
    tpu.vector_store %arg8[%610, %c0_74], %609 {strides = array<i32>} : memref<8x128xf32, #tpu.memory_space<vmem>>, vector<8x128xf32>,
    %c1_i32 = arith.constant 1 : i32
    return
  }
  func.func @transform_0(%arg0: i32) -> (i32, i32, i32) {
    %c0_i32 = arith.constant 0 : i32
    %c0_i32_0 = arith.constant 0 : i32
    %c0_i32_1 = arith.constant 0 : i32
    return %c0_i32, %arg0, %c0_i32_0 : i32, i32, i32
  }
  func.func @transform_1(%arg0: i32) -> i32 {
    %c0_i32 = arith.constant 0 : i32
    %c0_i32_0 = arith.constant 0 : i32
    return %c0_i32 : i32
  }
  func.func @transform_2(%arg0: i32) -> i32 {
    %c0_i32 = arith.constant 0 : i32
    %c0_i32_0 = arith.constant 0 : i32
    return %c0_i32 : i32
  }
  func.func @transform_3(%arg0: i32) -> i32 {
    %c0_i32 = arith.constant 0 : i32
    %c0_i32_0 = arith.constant 0 : i32
    return %c0_i32 : i32
  }
  func.func @transform_4(%arg0: i32) -> i32 {
    %c0_i32 = arith.constant 0 : i32
    %c0_i32_0 = arith.constant 0 : i32
    return %c0_i32 : i32
  }
  func.func @transform_5(%arg0: i32) -> i32 {
    %c0_i32 = arith.constant 0 : i32
    %c0_i32_0 = arith.constant 0 : i32
    return %c0_i32 : i32
  }
  func.func @transform_6(%arg0: i32) -> i32 {
    %c0_i32 = arith.constant 0 : i32
    %c0_i32_0 = arith.constant 0 : i32
    return %c0_i32 : i32
  }
  func.func @transform_7(%arg0: i32) -> (i32, i32) {
    %c0_i32 = arith.constant 0 : i32
    %c0_i32_0 = arith.constant 0 : i32
    return %arg0, %c0_i32 : i32, i32
  }
}

</mosaic_0001>

<llo_original>
// kernel: circle_model_v2.1
$region0: #{circle_model_v2.1}
  #allocation0 [shape = 'u32[]', space=smem, size = 0x4, offset = 0x4, fixed_abs, tag = 'smem constant byte address 0x4 - core index']
  #allocation1 [shape = 'u32[144,128]{1,0:T(1,128)}', space=vmem, size = 0x12000, scoped, tag = 'internal scratch']
  #allocation2 [shape = 'f32[1]{0:T(128)S(6)}', space=smem, size = 0x200, scoped, tag = 'scoped memory for circle_model_v2.1']
  %s0 = inlined_call_operand.vmem [shape: f32[2,8,128], index: 0, kind: input, shape index: {}]
  %s1 = inlined_call_operand.vmem [shape: f32[20], index: 1, kind: input, shape index: {}]
  %s2 = inlined_call_operand.vmem [shape: f32[10], index: 2, kind: input, shape index: {}]
  %s3 = inlined_call_operand.vmem [shape: f32[100], index: 3, kind: input, shape index: {}]
  %s4 = inlined_call_operand.vmem [shape: f32[10], index: 4, kind: input, shape index: {}]
  %s5 = inlined_call_operand.vmem [shape: f32[10], index: 5, kind: input, shape index: {}]
  %s6 = inlined_call_operand.<no memory space> [shape: f32[1], index: 6, kind: input, shape index: {}]
  %s7 = inlined_call_operand.hbm [shape: f32[8,128], index: 7, kind: output, shape index: {}]
  %s8 = sld [smem:[#allocation0]]
  $region58: #{circle_model_v2.1} parent=0
    _
  %s10 = ssub.s32 1, %s8
  %s11 = scalar_select 0, %s10, %s8
  %12 = sst [smem:[#allocation2]] %s6
  $region1: #{circle_model_v2.1} parent=0
    #allocation3 [shape = 'u8[512]{0}', space=smem, size = 0x200, scoped, tag = 'input window, operand 1, single buffered']
    #allocation4 [shape = 's32[1]{0}', space=sflag, size = 0x4, scoped, tag = 'scoped memory for circle_model_v2.1']
    #allocation5 [shape = 's32[1]{0}', space=sflag, size = 0x4, scoped, tag = 'scoped memory for circle_model_v2.1']
    #allocation6 [shape = 'u8[512]{0}', space=smem, size = 0x200, scoped, tag = 'input window, operand 2, single buffered']
    #allocation7 [shape = 's32[1]{0}', space=sflag, size = 0x4, scoped, tag = 'scoped memory for circle_model_v2.1']
    #allocation8 [shape = 'u8[512]{0}', space=smem, size = 0x200, scoped, tag = 'input window, operand 3, single buffered']
    #allocation9 [shape = 'u8[512]{0}', space=smem, size = 0x200, scoped, tag = 'input window, operand 4, single buffered']
    #allocation10 [shape = 's32[1]{0}', space=sflag, size = 0x4, scoped, tag = 'scoped memory for circle_model_v2.1']
    #allocation11 [shape = 'u8[512]{0}', space=smem, size = 0x200, scoped, tag = 'input window, operand 5, single buffered']
    #allocation12 [shape = 'u8[4096]{0}', space=vmem, size = 0x1000, scoped, tag = 'output window, operand 0, single buffered']
    %13 = vsyncpa [#allocation5], 0
    %14 = vsyncpa [#allocation7], 0
    %15 = vsyncpa [#allocation10], 0
    %16 = vsyncpa [#allocation4], 0
    // Predicated region
    $region2: #{circle_model_v2.1} parent=1 // pred_check
      _
    $region3: #{circle_model_v2.1} parent=1 // pred_check_branch
      %18 = sbr.rel (0) target = $region5
    $region4: #{circle_model_v2.1} parent=1 // pred_region
      _
    $region5: #{circle_model_v2.1} parent=1 // pred_fallthru
      _
    // Predicated region
    $region6: #{circle_model_v2.1} parent=1 // pred_check
      _
    $region7: #{circle_model_v2.1} parent=1 // pred_check_branch
      %20 = sbr.rel (0) target = $region9
    $region8: #{circle_model_v2.1} parent=1 // pred_region
      %s22 = ssub.s32 16, 16
      %23 = vsyncadd [#allocation5], %s22
      %s25 = sshll.u32 %s1, 4
      %s26 = int_to_ptr.vmem [resolvable:$true] %s25
      %28 = dma.vmem_to_smem %s26, 16, [#allocation3], [#allocation5]
    $region9: #{circle_model_v2.1} parent=1 // pred_fallthru
      _
    // Predicated region
    $region10: #{circle_model_v2.1} parent=1 // pred_check
      _
    $region11: #{circle_model_v2.1} parent=1 // pred_check_branch
      %30 = sbr.rel (0) target = $region13
    $region12: #{circle_model_v2.1} parent=1 // pred_region
      %s32 = ssub.s32 16, 16
      %33 = vsyncadd [#allocation7], %s32
      %s35 = sshll.u32 %s2, 4
      %s36 = int_to_ptr.vmem [resolvable:$true] %s35
      %38 = dma.vmem_to_smem %s36, 16, [#allocation6], [#allocation7]
    $region13: #{circle_model_v2.1} parent=1 // pred_fallthru
      _
    // Predicated region
    $region14: #{circle_model_v2.1} parent=1 // pred_check
      _
    $region15: #{circle_model_v2.1} parent=1 // pred_check_branch
      %40 = sbr.rel (0) target = $region17
    $region16: #{circle_model_v2.1} parent=1 // pred_region
      %s42 = ssub.s32 16, 16
      %43 = vsyncadd [#allocation7], %s42
      %s45 = sshll.u32 %s3, 4
      %s46 = int_to_ptr.vmem [resolvable:$true] %s45
      %48 = dma.vmem_to_smem %s46, 16, [#allocation8], [#allocation7]
    $region17: #{circle_model_v2.1} parent=1 // pred_fallthru
      _
    // Predicated region
    $region18: #{circle_model_v2.1} parent=1 // pred_check
      _
    $region19: #{circle_model_v2.1} parent=1 // pred_check_branch
      %50 = sbr.rel (0) target = $region21
    $region20: #{circle_model_v2.1} parent=1 // pred_region
      %s52 = ssub.s32 16, 16
      %53 = vsyncadd [#allocation10], %s52
      %s55 = sshll.u32 %s4, 4
      %s56 = int_to_ptr.vmem [resolvable:$true] %s55
      %58 = dma.vmem_to_smem %s56, 16, [#allocation9], [#allocation10]
    $region21: #{circle_model_v2.1} parent=1 // pred_fallthru
      _
    // Predicated region
    $region22: #{circle_model_v2.1} parent=1 // pred_check
      _
    $region23: #{circle_model_v2.1} parent=1 // pred_check_branch
      %60 = sbr.rel (0) target = $region25
    $region24: #{circle_model_v2.1} parent=1 // pred_region
      %s62 = ssub.s32 16, 16
      %63 = vsyncadd [#allocation10], %s62
      %s65 = sshll.u32 %s5, 4
      %s66 = int_to_ptr.vmem [resolvable:$true] %s65
      %68 = dma.vmem_to_smem %s66, 16, [#allocation11], [#allocation10]
    $region25: #{circle_model_v2.1} parent=1 // pred_fallthru
      _
    // Predicated region
    $region26: #{circle_model_v2.1} parent=1 // pred_check
      _
    $region27: #{circle_model_v2.1} parent=1 // pred_check_branch
      %70 = sbr.rel (0) target = $region29
    $region28: #{circle_model_v2.1} parent=1 // pred_region
      _
    $region29: #{circle_model_v2.1} parent=1 // pred_fallthru
      _
    // Predicated region
    $region30: #{circle_model_v2.1} parent=1 // pred_check
      _
    $region31: #{circle_model_v2.1} parent=1 // pred_check_branch
      %72 = sbr.rel (0) target = $region33
    $region32: #{circle_model_v2.1} parent=1 // pred_region
      %73 = dma.done [#allocation5], 16
    $region33: #{circle_model_v2.1} parent=1 // pred_fallthru
      _
    // Predicated region
    $region34: #{circle_model_v2.1} parent=1 // pred_check
      _
    $region35: #{circle_model_v2.1} parent=1 // pred_check_branch
      %75 = sbr.rel (0) target = $region37
    $region36: #{circle_model_v2.1} parent=1 // pred_region
      %76 = dma.done [#allocation7], 16
    $region37: #{circle_model_v2.1} parent=1 // pred_fallthru
      _
    // Predicated region
    $region38: #{circle_model_v2.1} parent=1 // pred_check
      _
    $region39: #{circle_model_v2.1} parent=1 // pred_check_branch
      %78 = sbr.rel (0) target = $region41
    $region40: #{circle_model_v2.1} parent=1 // pred_region
      %79 = dma.done [#allocation7], 16
    $region41: #{circle_model_v2.1} parent=1 // pred_fallthru
      _
    // Predicated region
    $region42: #{circle_model_v2.1} parent=1 // pred_check
      _
    $region43: #{circle_model_v2.1} parent=1 // pred_check_branch
      %81 = sbr.rel (0) target = $region45
    $region44: #{circle_model_v2.1} parent=1 // pred_region
      %82 = dma.done [#allocation10], 16
    $region45: #{circle_model_v2.1} parent=1 // pred_fallthru
      _
    // Predicated region
    $region46: #{circle_model_v2.1} parent=1 // pred_check
      _
    $region47: #{circle_model_v2.1} parent=1 // pred_check_branch
      %84 = sbr.rel (0) target = $region49
    $region48: #{circle_model_v2.1} parent=1 // pred_region
      %85 = dma.done [#allocation10], 16
    $region49: #{circle_model_v2.1} parent=1 // pred_fallthru
      _
    %86 = sfence
    %s87 = sld [smem:[#allocation3]]
    %s88 = sld [smem:[#allocation3 + $0x1]]
    %s89 = sld [smem:[#allocation3 + $0x2]]
    %s90 = sld [smem:[#allocation3 + $0x3]]
    %s91 = sld [smem:[#allocation3 + $0x4]]
    %s92 = sld [smem:[#allocation3 + $0x5]]
    %s93 = sld [smem:[#allocation3 + $0x6]]
    %s94 = sld [smem:[#allocation3 + $0x7]]
    %s95 = sld [smem:[#allocation3 + $0x8]]
    %s96 = sld [smem:[#allocation3 + $0x9]]
    %s97 = sld [smem:[#allocation3 + $0xa]]
    %s98 = sld [smem:[#allocation3 + $0xb]]
    %s99 = sld [smem:[#allocation3 + $0xc]]
    %s100 = sld [smem:[#allocation3 + $0xd]]
    %s101 = sld [smem:[#allocation3 + $0xe]]
    %s102 = sld [smem:[#allocation3 + $0xf]]
    %s103 = sld [smem:[#allocation3 + $0x10]]
    %s104 = sld [smem:[#allocation3 + $0x11]]
    %s105 = sld [smem:[#allocation3 + $0x12]]
    %s106 = sld [smem:[#allocation3 + $0x13]]
    %s107 = sld [smem:[#allocation6]]
    %s108 = sld [smem:[#allocation6 + $0x1]]
    %s109 = sld [smem:[#allocation6 + $0x2]]
    %s110 = sld [smem:[#allocation6 + $0x3]]
    %s111 = sld [smem:[#allocation6 + $0x4]]
    %s112 = sld [smem:[#allocation6 + $0x5]]
    %s113 = sld [smem:[#allocation6 + $0x6]]
    %s114 = sld [smem:[#allocation6 + $0x7]]
    %s115 = sld [smem:[#allocation6 + $0x8]]
    %s116 = sld [smem:[#allocation6 + $0x9]]
    %s117 = sld [smem:[#allocation8]]
    %s118 = sld [smem:[#allocation8 + $0x1]]
    %s119 = sld [smem:[#allocation8 + $0x2]]
    %s120 = sld [smem:[#allocation8 + $0x3]]
    %s121 = sld [smem:[#allocation8 + $0x4]]
    %s122 = sld [smem:[#allocation8 + $0x5]]
    %s123 = sld [smem:[#allocation8 + $0x6]]
    %s124 = sld [smem:[#allocation8 + $0x7]]
    %s125 = sld [smem:[#allocation8 + $0x8]]
    %s126 = sld [smem:[#allocation8 + $0x9]]
    %s127 = sld [smem:[#allocation8 + $0xa]]
    %s128 = sld [smem:[#allocation8 + $0xb]]
    %s129 = sld [smem:[#allocation8 + $0xc]]
    %s130 = sld [smem:[#allocation8 + $0xd]]
    %s131 = sld [smem:[#allocation8 + $0xe]]
    %s132 = sld [smem:[#allocation8 + $0xf]]
    %s133 = sld [smem:[#allocation8 + $0x10]]
    %s134 = sld [smem:[#allocation8 + $0x11]]
    %s135 = sld [smem:[#allocation8 + $0x12]]
    %s136 = sld [smem:[#allocation8 + $0x13]]
    %s137 = sld [smem:[#allocation8 + $0x14]]
    %s138 = sld [smem:[#allocation8 + $0x15]]
    %s139 = sld [smem:[#allocation8 + $0x16]]
    %s140 = sld [smem:[#allocation8 + $0x17]]
    %s141 = sld [smem:[#allocation8 + $0x18]]
    %s142 = sld [smem:[#allocation8 + $0x19]]
    %s143 = sld [smem:[#allocation8 + $0x1a]]
    %s144 = sld [smem:[#allocation8 + $0x1b]]
    %s145 = sld [smem:[#allocation8 + $0x1c]]
    %s146 = sld [smem:[#allocation8 + $0x1d]]
    %s147 = sld [smem:[#allocation8 + $0x1e]]
    %s148 = sld [smem:[#allocation8 + $0x1f]]
    %s149 = sld [smem:[#allocation8 + $0x20]]
    %s150 = sld [smem:[#allocation8 + $0x21]]
    %s151 = sld [smem:[#allocation8 + $0x22]]
    %s152 = sld [smem:[#allocation8 + $0x23]]
    %s153 = sld [smem:[#allocation8 + $0x24]]
    %s154 = sld [smem:[#allocation8 + $0x25]]
    %s155 = sld [smem:[#allocation8 + $0x26]]
    %s156 = sld [smem:[#allocation8 + $0x27]]
    %s157 = sld [smem:[#allocation8 + $0x28]]
    %s158 = sld [smem:[#allocation8 + $0x29]]
    %s159 = sld [smem:[#allocation8 + $0x2a]]
    %s160 = sld [smem:[#allocation8 + $0x2b]]
    %s161 = sld [smem:[#allocation8 + $0x2c]]
    %s162 = sld [smem:[#allocation8 + $0x2d]]
    %s163 = sld [smem:[#allocation8 + $0x2e]]
    %s164 = sld [smem:[#allocation8 + $0x2f]]
    %s165 = sld [smem:[#allocation8 + $0x30]]
    %s166 = sld [smem:[#allocation8 + $0x31]]
    %s167 = sld [smem:[#allocation8 + $0x32]]
    %s168 = sld [smem:[#allocation8 + $0x33]]
    %s169 = sld [smem:[#allocation8 + $0x34]]
    %s170 = sld [smem:[#allocation8 + $0x35]]
    %s171 = sld [smem:[#allocation8 + $0x36]]
    %s172 = sld [smem:[#allocation8 + $0x37]]
    %s173 = sld [smem:[#allocation8 + $0x38]]
    %s174 = sld [smem:[#allocation8 + $0x39]]
    %s175 = sld [smem:[#allocation8 + $0x3a]]
    %s176 = sld [smem:[#allocation8 + $0x3b]]
    %s177 = sld [smem:[#allocation8 + $0x3c]]
    %s178 = sld [smem:[#allocation8 + $0x3d]]
    %s179 = sld [smem:[#allocation8 + $0x3e]]
    %s180 = sld [smem:[#allocation8 + $0x3f]]
    %s181 = sld [smem:[#allocation8 + $0x40]]
    %s182 = sld [smem:[#allocation8 + $0x41]]
    %s183 = sld [smem:[#allocation8 + $0x42]]
    %s184 = sld [smem:[#allocation8 + $0x43]]
    %s185 = sld [smem:[#allocation8 + $0x44]]
    %s186 = sld [smem:[#allocation8 + $0x45]]
    %s187 = sld [smem:[#allocation8 + $0x46]]
    %s188 = sld [smem:[#allocation8 + $0x47]]
    %s189 = sld [smem:[#allocation8 + $0x48]]
    %s190 = sld [smem:[#allocation8 + $0x49]]
    %s191 = sld [smem:[#allocation8 + $0x4a]]
    %s192 = sld [smem:[#allocation8 + $0x4b]]
    %s193 = sld [smem:[#allocation8 + $0x4c]]
    %s194 = sld [smem:[#allocation8 + $0x4d]]
    %s195 = sld [smem:[#allocation8 + $0x4e]]
    %s196 = sld [smem:[#allocation8 + $0x4f]]
    %s197 = sld [smem:[#allocation8 + $0x50]]
    %s198 = sld [smem:[#allocation8 + $0x51]]
    %s199 = sld [smem:[#allocation8 + $0x52]]
    %s200 = sld [smem:[#allocation8 + $0x53]]
    %s201 = sld [smem:[#allocation8 + $0x54]]
    %s202 = sld [smem:[#allocation8 + $0x55]]
    %s203 = sld [smem:[#allocation8 + $0x56]]
    %s204 = sld [smem:[#allocation8 + $0x57]]
    %s205 = sld [smem:[#allocation8 + $0x58]]
    %s206 = sld [smem:[#allocation8 + $0x59]]
    %s207 = sld [smem:[#allocation8 + $0x5a]]
    %s208 = sld [smem:[#allocation8 + $0x5b]]
    %s209 = sld [smem:[#allocation8 + $0x5c]]
    %s210 = sld [smem:[#allocation8 + $0x5d]]
    %s211 = sld [smem:[#allocation8 + $0x5e]]
    %s212 = sld [smem:[#allocation8 + $0x5f]]
    %s213 = sld [smem:[#allocation8 + $0x60]]
    %s214 = sld [smem:[#allocation8 + $0x61]]
    %s215 = sld [smem:[#allocation8 + $0x62]]
    %s216 = sld [smem:[#allocation8 + $0x63]]
    %s217 = sld [smem:[#allocation9]]
    %s218 = sld [smem:[#allocation9 + $0x1]]
    %s219 = sld [smem:[#allocation9 + $0x2]]
    %s220 = sld [smem:[#allocation9 + $0x3]]
    %s221 = sld [smem:[#allocation9 + $0x4]]
    %s222 = sld [smem:[#allocation9 + $0x5]]
    %s223 = sld [smem:[#allocation9 + $0x6]]
    %s224 = sld [smem:[#allocation9 + $0x7]]
    %s225 = sld [smem:[#allocation9 + $0x8]]
    %s226 = sld [smem:[#allocation9 + $0x9]]
    %s227 = sld [smem:[#allocation11]]
    %s228 = sld [smem:[#allocation11 + $0x1]]
    %s229 = sld [smem:[#allocation11 + $0x2]]
    %s230 = sld [smem:[#allocation11 + $0x3]]
    %s231 = sld [smem:[#allocation11 + $0x4]]
    %s232 = sld [smem:[#allocation11 + $0x5]]
    %s233 = sld [smem:[#allocation11 + $0x6]]
    %s234 = sld [smem:[#allocation11 + $0x7]]
    %s235 = sld [smem:[#allocation11 + $0x8]]
    %s236 = sld [smem:[#allocation11 + $0x9]]
    %s237 = sld [smem:[#allocation2]]
    %v238 = vld [vmem:[%s0] sm:$0xff]
    %s239 = sadd.s32 0, 8
    %s240 = scalar_lea.vmem %s0, %s239
    %v241 = vld [vmem:[%s240] sm:$0xff]
    %v242 = vstv %s87
    %v243 = vmul.f32 %v242, %v238
    %v244 = vstv %s88
    %v245 = vmul.f32 %v244, %v241
    %v246 = vadd.f32 %v243, %v245
    %v247 = vstv %s107
    %v248 = vadd.f32 %v246, %v247
    %v249 = vmax.f32 %v248, 0.0
    %v250 = vstv %s89
    %v251 = vmul.f32 %v250, %v238
    %v252 = vstv %s90
    %v253 = vmul.f32 %v252, %v241
    %v254 = vadd.f32 %v251, %v253
    %v255 = vstv %s108
    %v256 = vadd.f32 %v254, %v255
    %v257 = vmax.f32 %v256, 0.0
    %v258 = vstv %s91
    %v259 = vmul.f32 %v258, %v238
    %v260 = vstv %s92
    %v261 = vmul.f32 %v260, %v241
    %v262 = vadd.f32 %v259, %v261
    %v263 = vstv %s109
    %v264 = vadd.f32 %v262, %v263
    %v265 = vmax.f32 %v264, 0.0
    %v266 = vstv %s93
    %v267 = vmul.f32 %v266, %v238
    %v268 = vstv %s94
    %v269 = vmul.f32 %v268, %v241
    %v270 = vadd.f32 %v267, %v269
    %v271 = vstv %s110
    %v272 = vadd.f32 %v270, %v271
    %v273 = vmax.f32 %v272, 0.0
    %v274 = vstv %s95
    %v275 = vmul.f32 %v274, %v238
    %v276 = vstv %s96
    %v277 = vmul.f32 %v276, %v241
    %v278 = vadd.f32 %v275, %v277
    %v279 = vstv %s111
    %v280 = vadd.f32 %v278, %v279
    %v281 = vmax.f32 %v280, 0.0
    %v282 = vstv %s97
    %v283 = vmul.f32 %v282, %v238
    %v284 = vstv %s98
    %v285 = vmul.f32 %v284, %v241
    %v286 = vadd.f32 %v283, %v285
    %v287 = vstv %s112
    %v288 = vadd.f32 %v286, %v287
    %v289 = vmax.f32 %v288, 0.0
    %v290 = vstv %s99
    %v291 = vmul.f32 %v290, %v238
    %v292 = vstv %s100
    %v293 = vmul.f32 %v292, %v241
    %v294 = vadd.f32 %v291, %v293
    %v295 = vstv %s113
    %v296 = vadd.f32 %v294, %v295
    %v297 = vmax.f32 %v296, 0.0
    %v298 = vstv %s101
    %v299 = vmul.f32 %v298, %v238
    %v300 = vstv %s102
    %v301 = vmul.f32 %v300, %v241
    %v302 = vadd.f32 %v299, %v301
    %v303 = vstv %s114
    %v304 = vadd.f32 %v302, %v303
    %v305 = vmax.f32 %v304, 0.0
    %v306 = vstv %s103
    %v307 = vmul.f32 %v306, %v238
    %v308 = vstv %s104
    %v309 = vmul.f32 %v308, %v241
    %v310 = vadd.f32 %v307, %v309
    %v311 = vstv %s115
    %v312 = vadd.f32 %v310, %v311
    %v313 = vmax.f32 %v312, 0.0
    %v314 = vstv %s105
    %v315 = vmul.f32 %v314, %v238
    %v316 = vstv %s106
    %v317 = vmul.f32 %v316, %v241
    %v318 = vadd.f32 %v315, %v317
    %v319 = vstv %s116
    %v320 = vadd.f32 %v318, %v319
    %v321 = vmax.f32 %v320, 0.0
    %v322 = vstv %s117
    %v323 = vmul.f32 %v322, %v249
    %v324 = vstv %s118
    %v325 = vmul.f32 %v324, %v257
    %v326 = vadd.f32 %v323, %v325
    %v327 = vstv %s119
    %v328 = vmul.f32 %v327, %v265
    %v329 = vadd.f32 %v326, %v328
    %v330 = vstv %s120
    %v331 = vmul.f32 %v330, %v273
    %v332 = vadd.f32 %v329, %v331
    %v333 = vstv %s121
    %v334 = vmul.f32 %v333, %v281
    %v335 = vadd.f32 %v332, %v334
    %v336 = vstv %s122
    %v337 = vmul.f32 %v336, %v289
    %v338 = vadd.f32 %v335, %v337
    %v339 = vstv %s123
    %v340 = vmul.f32 %v339, %v297
    %v341 = vadd.f32 %v338, %v340
    %v342 = vstv %s124
    %v343 = vmul.f32 %v342, %v305
    %v344 = vadd.f32 %v341, %v343
    %v345 = vstv %s125
    %v346 = vmul.f32 %v345, %v313
    %v347 = vadd.f32 %v344, %v346
    %v348 = vstv %s126
    %v349 = vmul.f32 %v348, %v321
    %v350 = vadd.f32 %v347, %v349
    %v351 = vstv %s217
    %v352 = vadd.f32 %v350, %v351
    %v353 = vmax.f32 %v352, 0.0
    %v354 = vstv %s127
    %v355 = vmul.f32 %v354, %v249
    %v356 = vstv %s128
    %v357 = vmul.f32 %v356, %v257
    %v358 = vadd.f32 %v355, %v357
    %v359 = vstv %s129
    %v360 = vmul.f32 %v359, %v265
    %v361 = vadd.f32 %v358, %v360
    %v362 = vstv %s130
    %v363 = vmul.f32 %v362, %v273
    %v364 = vadd.f32 %v361, %v363
    %v365 = vstv %s131
    %v366 = vmul.f32 %v365, %v281
    %v367 = vadd.f32 %v364, %v366
    %v368 = vstv %s132
    %v369 = vmul.f32 %v368, %v289
    %v370 = vadd.f32 %v367, %v369
    %v371 = vstv %s133
    %v372 = vmul.f32 %v371, %v297
    %v373 = vadd.f32 %v370, %v372
    %v374 = vstv %s134
    %v375 = vmul.f32 %v374, %v305
    %v376 = vadd.f32 %v373, %v375
    %v377 = vstv %s135
    %v378 = vmul.f32 %v377, %v313
    %v379 = vadd.f32 %v376, %v378
    %v380 = vstv %s136
    %v381 = vmul.f32 %v380, %v321
    %v382 = vadd.f32 %v379, %v381
    %v383 = vstv %s218
    %v384 = vadd.f32 %v382, %v383
    %v385 = vmax.f32 %v384, 0.0
    %v386 = vstv %s137
    %v387 = vmul.f32 %v386, %v249
    %v388 = vstv %s138
    %v389 = vmul.f32 %v388, %v257
    %v390 = vadd.f32 %v387, %v389
    %v391 = vstv %s139
    %v392 = vmul.f32 %v391, %v265
    %v393 = vadd.f32 %v390, %v392
    %v394 = vstv %s140
    %v395 = vmul.f32 %v394, %v273
    %v396 = vadd.f32 %v393, %v395
    %v397 = vstv %s141
    %v398 = vmul.f32 %v397, %v281
    %v399 = vadd.f32 %v396, %v398
    %v400 = vstv %s142
    %v401 = vmul.f32 %v400, %v289
    %v402 = vadd.f32 %v399, %v401
    %v403 = vstv %s143
    %v404 = vmul.f32 %v403, %v297
    %v405 = vadd.f32 %v402, %v404
    %v406 = vstv %s144
    %v407 = vmul.f32 %v406, %v305
    %v408 = vadd.f32 %v405, %v407
    %v409 = vstv %s145
    %v410 = vmul.f32 %v409, %v313
    %v411 = vadd.f32 %v408, %v410
    %v412 = vstv %s146
    %v413 = vmul.f32 %v412, %v321
    %v414 = vadd.f32 %v411, %v413
    %v415 = vstv %s219
    %v416 = vadd.f32 %v414, %v415
    %v417 = vmax.f32 %v416, 0.0
    %v418 = vstv %s147
    %v419 = vmul.f32 %v418, %v249
    %v420 = vstv %s148
    %v421 = vmul.f32 %v420, %v257
    %v422 = vadd.f32 %v419, %v421
    %v423 = vstv %s149
    %v424 = vmul.f32 %v423, %v265
    %v425 = vadd.f32 %v422, %v424
    %v426 = vstv %s150
    %v427 = vmul.f32 %v426, %v273
    %v428 = vadd.f32 %v425, %v427
    %v429 = vstv %s151
    %v430 = vmul.f32 %v429, %v281
    %v431 = vadd.f32 %v428, %v430
    %v432 = vstv %s152
    %v433 = vmul.f32 %v432, %v289
    %v434 = vadd.f32 %v431, %v433
    %v435 = vstv %s153
    %v436 = vmul.f32 %v435, %v297
    %v437 = vadd.f32 %v434, %v436
    %v438 = vstv %s154
    %v439 = vmul.f32 %v438, %v305
    %v440 = vadd.f32 %v437, %v439
    %v441 = vstv %s155
    %v442 = vmul.f32 %v441, %v313
    %v443 = vadd.f32 %v440, %v442
    %v444 = vstv %s156
    %v445 = vmul.f32 %v444, %v321
    %v446 = vadd.f32 %v443, %v445
    %v447 = vstv %s220
    %v448 = vadd.f32 %v446, %v447
    %v449 = vmax.f32 %v448, 0.0
    %v450 = vstv %s157
    %v451 = vmul.f32 %v450, %v249
    %v452 = vstv %s158
    %v453 = vmul.f32 %v452, %v257
    %v454 = vadd.f32 %v451, %v453
    %v455 = vstv %s159
    %v456 = vmul.f32 %v455, %v265
    %v457 = vadd.f32 %v454, %v456
    %v458 = vstv %s160
    %v459 = vmul.f32 %v458, %v273
    %v460 = vadd.f32 %v457, %v459
    %v461 = vstv %s161
    %v462 = vmul.f32 %v461, %v281
    %v463 = vadd.f32 %v460, %v462
    %v464 = vstv %s162
    %v465 = vmul.f32 %v464, %v289
    %v466 = vadd.f32 %v463, %v465
    %v467 = vstv %s163
    %v468 = vmul.f32 %v467, %v297
    %v469 = vadd.f32 %v466, %v468
    %v470 = vstv %s164
    %v471 = vmul.f32 %v470, %v305
    %v472 = vadd.f32 %v469, %v471
    %v473 = vstv %s165
    %v474 = vmul.f32 %v473, %v313
    %v475 = vadd.f32 %v472, %v474
    %v476 = vstv %s166
    %v477 = vmul.f32 %v476, %v321
    %v478 = vadd.f32 %v475, %v477
    %v479 = vstv %s221
    %v480 = vadd.f32 %v478, %v479
    %v481 = vmax.f32 %v480, 0.0
    %v482 = vstv %s167
    %v483 = vmul.f32 %v482, %v249
    %v484 = vstv %s168
    %v485 = vmul.f32 %v484, %v257
    %v486 = vadd.f32 %v483, %v485
    %v487 = vstv %s169
    %v488 = vmul.f32 %v487, %v265
    %v489 = vadd.f32 %v486, %v488
    %v490 = vstv %s170
    %v491 = vmul.f32 %v490, %v273
    %v492 = vadd.f32 %v489, %v491
    %v493 = vstv %s171
    %v494 = vmul.f32 %v493, %v281
    %v495 = vadd.f32 %v492, %v494
    %v496 = vstv %s172
    %v497 = vmul.f32 %v496, %v289
    %v498 = vadd.f32 %v495, %v497
    %v499 = vstv %s173
    %v500 = vmul.f32 %v499, %v297
    %v501 = vadd.f32 %v498, %v500
    %v502 = vstv %s174
    %v503 = vmul.f32 %v502, %v305
    %v504 = vadd.f32 %v501, %v503
    %v505 = vstv %s175
    %v506 = vmul.f32 %v505, %v313
    %v507 = vadd.f32 %v504, %v506
    %v508 = vstv %s176
    %v509 = vmul.f32 %v508, %v321
    %v510 = vadd.f32 %v507, %v509
    %v511 = vstv %s222
    %v512 = vadd.f32 %v510, %v511
    %v513 = vmax.f32 %v512, 0.0
    %v514 = vstv %s177
    %v515 = vmul.f32 %v514, %v249
    %v516 = vstv %s178
    %v517 = vmul.f32 %v516, %v257
    %v518 = vadd.f32 %v515, %v517
    %v519 = vstv %s179
    %v520 = vmul.f32 %v519, %v265
    %v521 = vadd.f32 %v518, %v520
    %v522 = vstv %s180
    %v523 = vmul.f32 %v522, %v273
    %v524 = vadd.f32 %v521, %v523
    %v525 = vstv %s181
    %v526 = vmul.f32 %v525, %v281
    %v527 = vadd.f32 %v524, %v526
    %v528 = vstv %s182
    %v529 = vmul.f32 %v528, %v289
    %v530 = vadd.f32 %v527, %v529
    %v531 = vstv %s183
    %v532 = vmul.f32 %v531, %v297
    %v533 = vadd.f32 %v530, %v532
    %v534 = vstv %s184
    %v535 = vmul.f32 %v534, %v305
    %v536 = vadd.f32 %v533, %v535
    %v537 = vstv %s185
    %v538 = vmul.f32 %v537, %v313
    %v539 = vadd.f32 %v536, %v538
    %v540 = vstv %s186
    %v541 = vmul.f32 %v540, %v321
    %v542 = vadd.f32 %v539, %v541
    %v543 = vstv %s223
    %v544 = vadd.f32 %v542, %v543
    %v545 = vmax.f32 %v544, 0.0
    %v546 = vstv %s187
    %v547 = vmul.f32 %v546, %v249
    %v548 = vstv %s188
    %v549 = vmul.f32 %v548, %v257
    %v550 = vadd.f32 %v547, %v549
    %v551 = vstv %s189
    %v552 = vmul.f32 %v551, %v265
    %v553 = vadd.f32 %v550, %v552
    %v554 = vstv %s190
    %v555 = vmul.f32 %v554, %v273
    %v556 = vadd.f32 %v553, %v555
    %v557 = vstv %s191
    %v558 = vmul.f32 %v557, %v281
    %v559 = vadd.f32 %v556, %v558
    %v560 = vstv %s192
    %v561 = vmul.f32 %v560, %v289
    %v562 = vadd.f32 %v559, %v561
    %v563 = vstv %s193
    %v564 = vmul.f32 %v563, %v297
    %v565 = vadd.f32 %v562, %v564
    %v566 = vstv %s194
    %v567 = vmul.f32 %v566, %v305
    %v568 = vadd.f32 %v565, %v567
    %v569 = vstv %s195
    %v570 = vmul.f32 %v569, %v313
    %v571 = vadd.f32 %v568, %v570
    %v572 = vstv %s196
    %v573 = vmul.f32 %v572, %v321
    %v574 = vadd.f32 %v571, %v573
    %v575 = vstv %s224
    %v576 = vadd.f32 %v574, %v575
    %v577 = vmax.f32 %v576, 0.0
    %v578 = vstv %s197
    %v579 = vmul.f32 %v578, %v249
    %v580 = vstv %s198
    %v581 = vmul.f32 %v580, %v257
    %v582 = vadd.f32 %v579, %v581
    %v583 = vstv %s199
    %v584 = vmul.f32 %v583, %v265
    %v585 = vadd.f32 %v582, %v584
    %v586 = vstv %s200
    %v587 = vmul.f32 %v586, %v273
    %v588 = vadd.f32 %v585, %v587
    %v589 = vstv %s201
    %v590 = vmul.f32 %v589, %v281
    %v591 = vadd.f32 %v588, %v590
    %v592 = vstv %s202
    %v593 = vmul.f32 %v592, %v289
    %v594 = vadd.f32 %v591, %v593
    %v595 = vstv %s203
    %v596 = vmul.f32 %v595, %v297
    %v597 = vadd.f32 %v594, %v596
    %v598 = vstv %s204
    %v599 = vmul.f32 %v598, %v305
    %v600 = vadd.f32 %v597, %v599
    %v601 = vstv %s205
    %v602 = vmul.f32 %v601, %v313
    %v603 = vadd.f32 %v600, %v602
    %v604 = vstv %s206
    %v605 = vmul.f32 %v604, %v321
    %v606 = vadd.f32 %v603, %v605
    %v607 = vstv %s225
    %v608 = vadd.f32 %v606, %v607
    %v609 = vmax.f32 %v608, 0.0
    %v610 = vstv %s207
    %v611 = vmul.f32 %v610, %v249
    %v612 = vstv %s208
    %v613 = vmul.f32 %v612, %v257
    %v614 = vadd.f32 %v611, %v613
    %v615 = vstv %s209
    %v616 = vmul.f32 %v615, %v265
    %v617 = vadd.f32 %v614, %v616
    %v618 = vstv %s210
    %v619 = vmul.f32 %v618, %v273
    %v620 = vadd.f32 %v617, %v619
    %v621 = vstv %s211
    %v622 = vmul.f32 %v621, %v281
    %v623 = vadd.f32 %v620, %v622
    %v624 = vstv %s212
    %v625 = vmul.f32 %v624, %v289
    %v626 = vadd.f32 %v623, %v625
    %v627 = vstv %s213
    %v628 = vmul.f32 %v627, %v297
    %v629 = vadd.f32 %v626, %v628
    %v630 = vstv %s214
    %v631 = vmul.f32 %v630, %v305
    %v632 = vadd.f32 %v629, %v631
    %v633 = vstv %s215
    %v634 = vmul.f32 %v633, %v313
    %v635 = vadd.f32 %v632, %v634
    %v636 = vstv %s216
    %v637 = vmul.f32 %v636, %v321
    %v638 = vadd.f32 %v635, %v637
    %v639 = vstv %s226
    %v640 = vadd.f32 %v638, %v639
    %v641 = vmax.f32 %v640, 0.0
    %v642 = vstv %s227
    %v643 = vmul.f32 %v642, %v353
    %v644 = vstv %s228
    %v645 = vmul.f32 %v644, %v385
    %v646 = vadd.f32 %v643, %v645
    %v647 = vstv %s229
    %v648 = vmul.f32 %v647, %v417
    %v649 = vadd.f32 %v646, %v648
    %v650 = vstv %s230
    %v651 = vmul.f32 %v650, %v449
    %v652 = vadd.f32 %v649, %v651
    %v653 = vstv %s231
    %v654 = vmul.f32 %v653, %v481
    %v655 = vadd.f32 %v652, %v654
    %v656 = vstv %s232
    %v657 = vmul.f32 %v656, %v513
    %v658 = vadd.f32 %v655, %v657
    %v659 = vstv %s233
    %v660 = vmul.f32 %v659, %v545
    %v661 = vadd.f32 %v658, %v660
    %v662 = vstv %s234
    %v663 = vmul.f32 %v662, %v577
    %v664 = vadd.f32 %v661, %v663
    %v665 = vstv %s235
    %v666 = vmul.f32 %v665, %v609
    %v667 = vadd.f32 %v664, %v666
    %v668 = vstv %s236
    %v669 = vmul.f32 %v668, %v641
    %v670 = vadd.f32 %v667, %v669
    %v671 = vstv %s237
    %v672 = vadd.f32 %v670, %v671
    %673 = vst [vmem:[#allocation12] sm:$0xff] %v672
    // Predicated region
    $region50: #{circle_model_v2.1} parent=1 // pred_check
      _
    $region51: #{circle_model_v2.1} parent=1 // pred_check_branch
      %675 = sbr.rel (0) target = $region53
    $region52: #{circle_model_v2.1} parent=1 // pred_region
      %s677 = ssub.s32 128, 128
      %678 = vsyncadd [#allocation4], %s677
      %s680 = sshll.u32 [#allocation12], 4
      %s681 = int_to_ptr.vmem [resolvable:$true] %s680
      %683 = dma.vmem_to_hbm [thread:$0]  %s681, 128, %s7, [#allocation4]
    $region53: #{circle_model_v2.1} parent=1 // pred_fallthru
      _
    // Predicated region
    $region54: #{circle_model_v2.1} parent=1 // pred_check
      _
    $region55: #{circle_model_v2.1} parent=1 // pred_check_branch
      %685 = sbr.rel (0) target = $region57
    $region56: #{circle_model_v2.1} parent=1 // pred_region
      %686 = dma.done [#allocation4], 128
    $region57: #{circle_model_v2.1} parent=1 // pred_fallthru
      _
    %687 = vsyncpa [#allocation4], 1
    %688 = vsyncpa [#allocation5], 1
    %689 = vsyncpa [#allocation7], 1
    %690 = vsyncpa [#allocation10], 1

</llo_original>
